<compile_context>
chip_gen: v6e
topology: v6e:2x2x1
jax: 0.10.0
libtpu: 0.0.40
codegen_flags: <defaults>
</compile_context>

<pallas_src>
import math
import jax
import jax.numpy as jnp
from jax.experimental import pallas as pl

# --- small config consistent with the module (module defaults: nfeat=nhid=768, nheads=4) ---
BATCH = 2
NODES = 8          # graph nodes per batch element (seq length of input_emb)
NFEAT = 32         # scaled-down nfeat
NHID = NFEAT       # residual (xx + x) requires nhid == nfeat, as in the module (768 == 768)
HEADS = 4
ALPHA = 0.2        # LeakyReLU negative slope
MASK_VAL = -9e15   # pyGAT masking constant


def _elu(v):
    # F.elu with alpha=1.0; exp clamped so the unselected branch never overflows.
    return jnp.where(v > 0.0, v, jnp.exp(jnp.minimum(v, 0.0)) - 1.0)


def _leaky_relu(v):
    return jnp.where(v > 0.0, v, ALPHA * v)


def _softmax_last(logits):
    logits = logits - jnp.max(logits, axis=-1, keepdims=True)
    p = jnp.exp(logits)
    return p / jnp.sum(p, axis=-1, keepdims=True)   # exact division kept on purpose


def gat_ext_kernel(x_ref, adjb_ref, mask_ref,
                   wp_ref, a1h_ref, a2h_ref,
                   wo_ref, a1o_ref, a2o_ref,
                   wc_ref, bc_ref,
                   y_ref, score_ref):
    B, N, F = x_ref.shape
    H, D = a1h_ref.shape
    BN = B * N

    x = x_ref[...].astype(jnp.float32)                      # (B, N, F)
    x2 = x.reshape(BN, F)                                   # graphs stacked along sublanes
    mask = mask_ref[...]                                    # (B, N)

    # Additive adjacency bias, computed once and reused by both attention softmaxes.
    bias = jnp.where(adjb_ref[...] > 0.0, 0.0, MASK_VAL)    # (BN, BN), block-diagonal mask

    # ---- multi-head projection: one lane-dense matmul with heads packed along lanes ----
    whp = jnp.dot(x2, wp_ref[...], preferred_element_type=jnp.float32)   # (BN, H*D) = (16, 128)
    # Per-head view (H, BN, D) via 2-D transpose + sublane-aligned split + minor-dim swap
    # (avoids a general 3-D major<->minor transpose).
    wh = jnp.swapaxes(jnp.transpose(whp).reshape(H, D, BN), -1, -2)      # (H, BN, D)

    # Attention logits on the VPU (broadcast-multiply) + XLU lane reduce.
    a1 = a1h_ref[...]                                        # (H, D)
    a2 = a2h_ref[...]
    e_src = jnp.sum(wh * a1[:, None, :], axis=-1, keepdims=True)         # (H, BN, 1)
    e_dst = jnp.sum(wh * a2[:, None, :], axis=-1)[:, None, :]            # (H, 1, BN)
    e = _leaky_relu(e_src + e_dst)                                       # (H, BN, BN)
    attn = _softmax_last(e + bias[None, :, :])               # block-diag bias keeps graphs apart
    # GAT-internal F.dropout has p=0.0 -> identity.

    ctx = jnp.einsum('hij,hjd->hid', attn, wh,
                     preferred_element_type=jnp.float32)                 # (H, BN, D)
    ctx = _elu(ctx)                                                      # concat=True heads use ELU

    # ---- out_att (concat=False): lane-packed concat -> one (BN, H*D) @ (H*D, D) matmul ----
    ctx_p = jnp.transpose(jnp.swapaxes(ctx, -1, -2).reshape(H * D, BN))  # (BN, H*D)
    wh_o = jnp.dot(ctx_p, wo_ref[...], preferred_element_type=jnp.float32)   # (BN, D)

    eo_src = jnp.sum(wh_o * a1o_ref[...], axis=-1, keepdims=True)                    # (BN, 1)
    eo_dst = jnp.transpose(jnp.sum(wh_o * a2o_ref[...], axis=-1, keepdims=True))     # (1, BN)
    attn_o = _softmax_last(_leaky_relu(eo_src + eo_dst) + bias)          # (BN, BN)
    h_o = jnp.dot(attn_o, wh_o, preferred_element_type=jnp.float32)      # (BN, D)

    # GAT wrapper: F.elu(out_att(...)), eval-mode dropout(p=0.5), residual add.
    # TODO(synk): training-mode dropout (p=0.5) is not implemented (inference forward only).
    y = (_elu(h_o) + x2).reshape(B, N, F)
    y_ref[...] = y.astype(y_ref.dtype)

    # ---- Classifier: sigmoid(y @ w_c + b_c) * mask_node, as VPU multiply + lane reduce ----
    s = jnp.sum(y * wc_ref[...], axis=-1) + bc_ref[...]                  # (B, N)
    s = 1.0 / (1.0 + jnp.exp(-s))                                        # exact sigmoid
    score_ref[...] = (s * mask).astype(score_ref.dtype)


def encoder_gnn_ext_forward(input_emb, adj, mask_node, params):
    """input_emb: (B, N, F), adj: (B, N, N), mask_node: (B, N) -> (yy, node_scores)."""
    B, N, F = input_emb.shape
    w_h, a1_h, a2_h, w_o, a1_o, a2_o, w_c, b_c = params
    H, _, D = w_h.shape
    adj = adj.astype(jnp.float32)

    # Wrapper-side layout plumbing (tiny, one-off):
    #  * heads packed along the lane axis of W / the a-vectors,
    #  * out_att weight flattened to (H*D, D), matching torch.cat(heads, dim=1) @ W,
    #  * the batch of graphs folded into one block-diagonal super-graph adjacency so the
    #    kernel runs as a single grid step over B*N node rows.
    w_packed = jnp.transpose(w_h, (1, 0, 2)).reshape(F, H * D)   # column h*D+d  <-  W_h[:, d]
    a1_hd = a1_h.reshape(H, D)
    a2_hd = a2_h.reshape(H, D)
    w_o_flat = w_o.reshape(H * D, D)
    w_c_row = w_c.reshape(1, D)

    adj_big = jnp.zeros((B * N, B * N), jnp.float32)
    for b in range(B):
        adj_big = adj_big.at[b * N:(b + 1) * N, b * N:(b + 1) * N].set(adj[b])

    yy, scores = pl.pallas_call(
        gat_ext_kernel,
        out_shape=(jax.ShapeDtypeStruct((B, N, F), input_emb.dtype),
                   jax.ShapeDtypeStruct((B, N), jnp.float32)),
        # Single invocation, no grid: whole (KB-scale) arrays live in VMEM, no per-step
        # grid overhead and no double-buffering of the replicated weight blocks.
    )(input_emb, adj_big, mask_node.astype(jnp.float32),
      w_packed, a1_hd, a2_hd, w_o_flat, a1_o, a2_o, w_c_row, b_c)
    return yy, scores


def init_params(key):
    ks = jax.random.split(key, 8)

    def xavier(k, shape):
        fan_in, fan_out = shape[-2], shape[-1]
        limit = 1.414 * math.sqrt(6.0 / (fan_in + fan_out))
        return jax.random.uniform(k, shape, jnp.float32, -limit, limit)

    w_h = xavier(ks[0], (HEADS, NFEAT, NHID))    # per-head W, stacked
    a1_h = xavier(ks[1], (HEADS, 1, NHID))       # a[:out_features] per head (as a row)
    a2_h = xavier(ks[2], (HEADS, 1, NHID))       # a[out_features:] per head
    w_o = xavier(ks[3], (HEADS, NHID, NHID))     # out_att.W of shape (HEADS*NHID, NHID), head-blocked
    a1_o = xavier(ks[4], (1, NHID))
    a2_o = xavier(ks[5], (1, NHID))
    w_c = jax.random.normal(ks[6], (NHID, 1), jnp.float32) * 0.02   # Classifier.linear1 weight^T
    b_c = jnp.zeros((1, 1), jnp.float32)                            # Classifier.linear1 bias
    return (w_h, a1_h, a2_h, w_o, a1_o, a2_o, w_c, b_c)


def _ref_forward(input_emb, adj, mask_node, params):
    """Pure-JAX reference mirroring the PyTorch module (for a correctness check)."""
    w_h, a1_h, a2_h, w_o, a1_o, a2_o, w_c, b_c = params
    hp = jax.lax.Precision.HIGHEST

    def leaky(v): return jnp.where(v > 0, v, ALPHA * v)
    def elu(v): return jnp.where(v > 0, v, jnp.exp(jnp.minimum(v, 0.0)) - 1.0)

    def masked_softmax(e, a):
        lg = jnp.where(a > 0, e, MASK_VAL)
        lg = lg - jnp.max(lg, axis=-1, keepdims=True)
        p = jnp.exp(lg)
        return p / jnp.sum(p, axis=-1, keepdims=True)

    outs = []
    for b in range(input_emb.shape[0]):
        x, a = input_emb[b], adj[b]
        heads = []
        for h in range(HEADS):
            wh = jnp.dot(x, w_h[h], precision=hp)
            e = leaky(jnp.dot(wh, a1_h[h].T, precision=hp) +
                      jnp.dot(wh, a2_h[h].T, precision=hp).T)
            heads.append(elu(jnp.dot(masked_softmax(e, a), wh, precision=hp)))
        xx = jnp.concatenate(heads, axis=1)
        wh_o = jnp.dot(xx, w_o.reshape(HEADS * NHID, NHID), precision=hp)
        e = leaky(jnp.dot(wh_o, a1_o.T, precision=hp) +
                  jnp.dot(wh_o, a2_o.T, precision=hp).T)
        y = elu(jnp.dot(masked_softmax(e, a), wh_o, precision=hp)) + x
        outs.append(y)
    yy = jnp.stack(outs, 0)
    s = jax.nn.sigmoid(jnp.squeeze(jnp.dot(yy, w_c, precision=hp), -1) + b_c[0, 0])
    return yy, s * mask_node.astype(jnp.float32)


if __name__ == "__main__":
    key = jax.random.PRNGKey(0)
    k_x, k_a, k_m, k_p = jax.random.split(key, 4)

    input_emb = jax.random.normal(k_x, (BATCH, NODES, NFEAT), jnp.float32)
    # Random {0,1} adjacency with self-loops (so no node has an empty neighborhood).
    adj = (jax.random.uniform(k_a, (BATCH, NODES, NODES)) > 0.5).astype(jnp.float32)
    adj = jnp.maximum(adj, jnp.eye(NODES, dtype=jnp.float32)[None])
    mask_node = (jax.random.uniform(k_m, (BATCH, NODES)) > 0.2).astype(jnp.float32)

    params = init_params(k_p)

    yy, node_scores = encoder_gnn_ext_forward(input_emb, adj, mask_node, params)
    jax.block_until_ready(yy)
    jax.block_until_ready(node_scores)

    assert yy.shape == (BATCH, NODES, NFEAT)
    assert node_scores.shape == (BATCH, NODES)

    yy_ref, scores_ref = _ref_forward(input_emb, adj, mask_node, params)
    assert bool(jnp.allclose(yy, yy_ref, atol=5e-2, rtol=5e-2))
    assert bool(jnp.allclose(node_scores, scores_ref, atol=5e-2, rtol=5e-2))

    print("KERNEL_OK")
</pallas_src>

<mosaic_0001>
module attributes {stable_mosaic.version = 11 : i64} {
  func.func @gat_ext_kernel(%arg0: memref<2x8x32xf32, #tpu.memory_space<vmem>>, %arg1: memref<16x16xf32, #tpu.memory_space<vmem>>, %arg2: memref<2x8xf32, #tpu.memory_space<vmem>>, %arg3: memref<32x128xf32, #tpu.memory_space<vmem>>, %arg4: memref<4x32xf32, #tpu.memory_space<vmem>>, %arg5: memref<4x32xf32, #tpu.memory_space<vmem>>, %arg6: memref<128x32xf32, #tpu.memory_space<vmem>>, %arg7: memref<1x32xf32, #tpu.memory_space<vmem>>, %arg8: memref<1x32xf32, #tpu.memory_space<vmem>>, %arg9: memref<1x32xf32, #tpu.memory_space<vmem>>, %arg10: memref<1x1xf32, #tpu.memory_space<vmem>>, %arg11: memref<2x8x32xf32, #tpu.memory_space<vmem>>, %arg12: memref<2x8xf32, #tpu.memory_space<vmem>>) attributes {dimension_semantics = [], scalar_prefetch = 0 : i64, scratch_operands = 0 : i64, tpu.core_type = #tpu.core_type<tc>} {
    %c0 = arith.constant 0 : index
    %c0_0 = arith.constant 0 : index
    %c0_1 = arith.constant 0 : index
    %0 = vector.load %arg0[%c0, %c0_0, %c0_1] : memref<2x8x32xf32, #tpu.memory_space<vmem>>, vector<2x8x32xf32>
    %1 = vector.shape_cast %0 : vector<2x8x32xf32> to vector<16x32xf32>
    %c0_2 = arith.constant 0 : index
    %c0_3 = arith.constant 0 : index
    %2 = vector.load %arg2[%c0_2, %c0_3] : memref<2x8xf32, #tpu.memory_space<vmem>>, vector<2x8xf32>
    %c0_4 = arith.constant 0 : index
    %c0_5 = arith.constant 0 : index
    %3 = vector.load %arg1[%c0_4, %c0_5] : memref<16x16xf32, #tpu.memory_space<vmem>>, vector<16x16xf32>
    %cst = arith.constant 0.000000e+00 : f32
    %4 = vector.broadcast %cst : f32 to vector<16x16xf32>
    %5 = arith.cmpf ogt, %3, %4 : vector<16x16xf32>
    %cst_6 = arith.constant 0.000000e+00 : f32
    %cst_7 = arith.constant -9.000000e+15 : f32
    %6 = vector.broadcast %cst_6 : f32 to vector<16x16xf32>
    %7 = vector.broadcast %cst_7 : f32 to vector<16x16xf32>
    %8 = arith.select %5, %6, %7 : vector<16x16xi1>, vector<16x16xf32>
    %c0_8 = arith.constant 0 : index
    %c0_9 = arith.constant 0 : index
    %9 = vector.load %arg3[%c0_8, %c0_9] : memref<32x128xf32, #tpu.memory_space<vmem>>, vector<32x128xf32>
    %cst_10 = arith.constant dense<0.000000e+00> : vector<16x128xf32>
    %10 = tpu.matmul %1, %9, %cst_10 {dimension_numbers = #tpu.dot_dimension_numbers<[1], [0], [0], [1], [0, 0, 1, 1], [], []>} : vector<16x32xf32>, vector<32x128xf32>, vector<16x128xf32> -> vector<16x128xf32>
    %11 = tpu.transpose %10, [1, 0] : vector<16x128xf32> -> vector<128x16xf32>
    %12 = vector.shape_cast %11 : vector<128x16xf32> to vector<4x32x16xf32>
    %13 = tpu.transpose %12, [0, 2, 1] : vector<4x32x16xf32> -> vector<4x16x32xf32>
    %c0_11 = arith.constant 0 : index
    %c0_12 = arith.constant 0 : index
    %14 = vector.load %arg4[%c0_11, %c0_12] : memref<4x32xf32, #tpu.memory_space<vmem>>, vector<4x32xf32>
    %c0_13 = arith.constant 0 : index
    %c0_14 = arith.constant 0 : index
    %15 = vector.load %arg5[%c0_13, %c0_14] : memref<4x32xf32, #tpu.memory_space<vmem>>, vector<4x32xf32>
    %16 = vector.shape_cast %14 : vector<4x32xf32> to vector<4x1x32xf32>
    %17 = vector.broadcast %16 : vector<4x1x32xf32> to vector<4x16x32xf32>
    %18 = arith.mulf %13, %17 : vector<4x16x32xf32>
    %cst_15 = arith.constant dense<0.000000e+00> : vector<4x16xf32>
    %19 = vector.multi_reduction <add>, %18, %cst_15 [2] : vector<4x16x32xf32> to vector<4x16xf32>
    %20 = vector.shape_cast %19 : vector<4x16xf32> to vector<4x16x1xf32>
    %21 = vector.shape_cast %15 : vector<4x32xf32> to vector<4x1x32xf32>
    %22 = vector.broadcast %21 : vector<4x1x32xf32> to vector<4x16x32xf32>
    %23 = arith.mulf %13, %22 : vector<4x16x32xf32>
    %cst_16 = arith.constant dense<0.000000e+00> : vector<4x16xf32>
    %24 = vector.multi_reduction <add>, %23, %cst_16 [2] : vector<4x16x32xf32> to vector<4x16xf32>
    %25 = vector.shape_cast %24 : vector<4x16xf32> to vector<4x1x16xf32>
    %26 = vector.broadcast %20 : vector<4x16x1xf32> to vector<4x16x16xf32>
    %27 = vector.broadcast %25 : vector<4x1x16xf32> to vector<4x16x16xf32>
    %28 = arith.addf %26, %27 : vector<4x16x16xf32>
    %cst_17 = arith.constant 0.000000e+00 : f32
    %29 = vector.broadcast %cst_17 : f32 to vector<4x16x16xf32>
    %30 = arith.cmpf ogt, %28, %29 : vector<4x16x16xf32>
    %cst_18 = arith.constant 2.000000e-01 : f32
    %31 = vector.broadcast %cst_18 : f32 to vector<4x16x16xf32>
    %32 = arith.mulf %31, %28 : vector<4x16x16xf32>
    %33 = arith.select %30, %28, %32 : vector<4x16x16xi1>, vector<4x16x16xf32>
    %34 = vector.shape_cast %8 : vector<16x16xf32> to vector<1x16x16xf32>
    %35 = vector.broadcast %34 : vector<1x16x16xf32> to vector<4x16x16xf32>
    %36 = arith.addf %33, %35 : vector<4x16x16xf32>
    %cst_19 = arith.constant dense<0xFF800000> : vector<4x16xf32>
    %37 = vector.multi_reduction <maximumf>, %36, %cst_19 [2] : vector<4x16x16xf32> to vector<4x16xf32>
    %38 = vector.shape_cast %37 : vector<4x16xf32> to vector<4x16x1xf32>
    %39 = vector.broadcast %38 : vector<4x16x1xf32> to vector<4x16x16xf32>
    %40 = arith.subf %36, %39 : vector<4x16x16xf32>
    %41 = math.exp %40 : vector<4x16x16xf32>
    %cst_20 = arith.constant dense<0.000000e+00> : vector<4x16xf32>
    %42 = vector.multi_reduction <add>, %41, %cst_20 [2] : vector<4x16x16xf32> to vector<4x16xf32>
    %43 = vector.shape_cast %42 : vector<4x16xf32> to vector<4x16x1xf32>
    %44 = vector.broadcast %43 : vector<4x16x1xf32> to vector<4x16x16xf32>
    %45 = arith.divf %41, %44 : vector<4x16x16xf32>
    "tpu.trace_start"() <{level = 10 : i32, message = "hij,hjd->hid"}> : () -> ()
    %cst_21 = arith.constant dense<0.000000e+00> : vector<4x16x32xf32>
    %46 = tpu.matmul %45, %13, %cst_21 {dimension_numbers = #tpu.dot_dimension_numbers<[2], [1], [1], [2], [0, 0, 0, 1, 1, 2], [0], [0]>} : vector<4x16x16xf32>, vector<4x16x32xf32>, vector<4x16x32xf32> -> vector<4x16x32xf32>
    %cst_22 = arith.constant 0.000000e+00 : f32
    "tpu.trace_stop"() : () -> ()
    %47 = vector.broadcast %cst_22 : f32 to vector<4x16x32xf32>
    %48 = arith.cmpf ogt, %46, %47 : vector<4x16x32xf32>
    %cst_23 = arith.constant 0.000000e+00 : f32
    %49 = vector.broadcast %cst_23 : f32 to vector<4x16x32xf32>
    %50 = arith.minimumf %46, %49 : vector<4x16x32xf32>
    %51 = math.exp %50 : vector<4x16x32xf32>
    %cst_24 = arith.constant 1.000000e+00 : f32
    %52 = vector.broadcast %cst_24 : f32 to vector<4x16x32xf32>
    %53 = arith.subf %51, %52 : vector<4x16x32xf32>
    %54 = arith.select %48, %46, %53 : vector<4x16x32xi1>, vector<4x16x32xf32>
    %55 = tpu.transpose %54, [0, 2, 1] : vector<4x16x32xf32> -> vector<4x32x16xf32>
    %56 = vector.shape_cast %55 : vector<4x32x16xf32> to vector<128x16xf32>
    %57 = tpu.transpose %56, [1, 0] : vector<128x16xf32> -> vector<16x128xf32>
    %c0_25 = arith.constant 0 : index
    %c0_26 = arith.constant 0 : index
    %58 = vector.load %arg6[%c0_25, %c0_26] : memref<128x32xf32, #tpu.memory_space<vmem>>, vector<128x32xf32>
    %cst_27 = arith.constant dense<0.000000e+00> : vector<16x32xf32>
    %59 = tpu.matmul %57, %58, %cst_27 {dimension_numbers = #tpu.dot_dimension_numbers<[1], [0], [0], [1], [0, 0, 1, 1], [], []>} : vector<16x128xf32>, vector<128x32xf32>, vector<16x32xf32> -> vector<16x32xf32>
    %c0_28 = arith.constant 0 : index
    %c0_29 = arith.constant 0 : index
    %60 = vector.load %arg7[%c0_28, %c0_29] : memref<1x32xf32, #tpu.memory_space<vmem>>, vector<1x32xf32>
    %61 = vector.broadcast %60 : vector<1x32xf32> to vector<16x32xf32>
    %62 = arith.mulf %59, %61 : vector<16x32xf32>
    %cst_30 = arith.constant dense<0.000000e+00> : vector<16xf32>
    %63 = vector.multi_reduction <add>, %62, %cst_30 [1] : vector<16x32xf32> to vector<16xf32>
    %64 = vector.shape_cast %63 : vector<16xf32> to vector<16x1xf32>
    %c0_31 = arith.constant 0 : index
    %c0_32 = arith.constant 0 : index
    %65 = vector.load %arg8[%c0_31, %c0_32] : memref<1x32xf32, #tpu.memory_space<vmem>>, vector<1x32xf32>
    %66 = vector.broadcast %65 : vector<1x32xf32> to vector<16x32xf32>
    %67 = arith.mulf %59, %66 : vector<16x32xf32>
    %cst_33 = arith.constant dense<0.000000e+00> : vector<16xf32>
    %68 = vector.multi_reduction <add>, %67, %cst_33 [1] : vector<16x32xf32> to vector<16xf32>
    %69 = vector.shape_cast %68 : vector<16xf32> to vector<16x1xf32>
    %70 = tpu.transpose %69, [1, 0] : vector<16x1xf32> -> vector<1x16xf32>
    %71 = vector.broadcast %64 : vector<16x1xf32> to vector<16x16xf32>
    %72 = vector.broadcast %70 : vector<1x16xf32> to vector<16x16xf32>
    %73 = arith.addf %71, %72 : vector<16x16xf32>
    %cst_34 = arith.constant 0.000000e+00 : f32
    %74 = vector.broadcast %cst_34 : f32 to vector<16x16xf32>
    %75 = arith.cmpf ogt, %73, %74 : vector<16x16xf32>
    %cst_35 = arith.constant 2.000000e-01 : f32
    %76 = vector.broadcast %cst_35 : f32 to vector<16x16xf32>
    %77 = arith.mulf %76, %73 : vector<16x16xf32>
    %78 = arith.select %75, %73, %77 : vector<16x16xi1>, vector<16x16xf32>
    %79 = arith.addf %78, %8 : vector<16x16xf32>
    %cst_36 = arith.constant dense<0xFF800000> : vector<16xf32>
    %80 = vector.multi_reduction <maximumf>, %79, %cst_36 [1] : vector<16x16xf32> to vector<16xf32>
    %81 = vector.shape_cast %80 : vector<16xf32> to vector<16x1xf32>
    %82 = vector.broadcast %81 : vector<16x1xf32> to vector<16x16xf32>
    %83 = arith.subf %79, %82 : vector<16x16xf32>
    %84 = math.exp %83 : vector<16x16xf32>
    %cst_37 = arith.constant dense<0.000000e+00> : vector<16xf32>
    %85 = vector.multi_reduction <add>, %84, %cst_37 [1] : vector<16x16xf32> to vector<16xf32>
    %86 = vector.shape_cast %85 : vector<16xf32> to vector<16x1xf32>
    %87 = vector.broadcast %86 : vector<16x1xf32> to vector<16x16xf32>
    %88 = arith.divf %84, %87 : vector<16x16xf32>
    %cst_38 = arith.constant dense<0.000000e+00> : vector<16x32xf32>
    %89 = tpu.matmul %88, %59, %cst_38 {dimension_numbers = #tpu.dot_dimension_numbers<[1], [0], [0], [1], [0, 0, 1, 1], [], []>} : vector<16x16xf32>, vector<16x32xf32>, vector<16x32xf32> -> vector<16x32xf32>
    %cst_39 = arith.constant 0.000000e+00 : f32
    %90 = vector.broadcast %cst_39 : f32 to vector<16x32xf32>
    %91 = arith.cmpf ogt, %89, %90 : vector<16x32xf32>
    %cst_40 = arith.constant 0.000000e+00 : f32
    %92 = vector.broadcast %cst_40 : f32 to vector<16x32xf32>
    %93 = arith.minimumf %89, %92 : vector<16x32xf32>
    %94 = math.exp %93 : vector<16x32xf32>
    %cst_41 = arith.constant 1.000000e+00 : f32
    %95 = vector.broadcast %cst_41 : f32 to vector<16x32xf32>
    %96 = arith.subf %94, %95 : vector<16x32xf32>
    %97 = arith.select %91, %89, %96 : vector<16x32xi1>, vector<16x32xf32>
    %98 = arith.addf %97, %1 : vector<16x32xf32>
    %99 = vector.shape_cast %98 : vector<16x32xf32> to vector<2x8x32xf32>
    %c0_42 = arith.constant 0 : index
    %c0_43 = arith.constant 0 : index
    %c0_44 = arith.constant 0 : index
    %100 = vector.load %arg11[%c0_42, %c0_43, %c0_44] : memref<2x8x32xf32, #tpu.memory_space<vmem>>, vector<2x8x32xf32>
    tpu.vector_store %arg11[%c0_42, %c0_43, %c0_44], %99 {strides = array<i32>} : memref<2x8x32xf32, #tpu.memory_space<vmem>>, vector<2x8x32xf32>,
    %c0_45 = arith.constant 0 : index
    %c0_46 = arith.constant 0 : index
    %101 = vector.load %arg9[%c0_45, %c0_46] : memref<1x32xf32, #tpu.memory_space<vmem>>, vector<1x32xf32>
    %102 = vector.shape_cast %101 : vector<1x32xf32> to vector<1x1x32xf32>
    %103 = vector.broadcast %102 : vector<1x1x32xf32> to vector<2x8x32xf32>
    %104 = arith.mulf %99, %103 : vector<2x8x32xf32>
    %cst_47 = arith.constant dense<0.000000e+00> : vector<2x8xf32>
    %105 = vector.multi_reduction <add>, %104, %cst_47 [2] : vector<2x8x32xf32> to vector<2x8xf32>
    %c0_48 = arith.constant 0 : index
    %c0_49 = arith.constant 0 : index
    %106 = vector.load %arg10[%c0_48, %c0_49] : memref<1x1xf32, #tpu.memory_space<vmem>>, vector<1x1xf32>
    %107 = vector.broadcast %106 : vector<1x1xf32> to vector<2x8xf32>
    %108 = arith.addf %105, %107 : vector<2x8xf32>
    %cst_50 = arith.constant 0.000000e+00 : f32
    %109 = vector.broadcast %cst_50 : f32 to vector<2x8xf32>
    %110 = arith.subf %109, %108 : vector<2x8xf32>
    %111 = math.exp %110 : vector<2x8xf32>
    %cst_51 = arith.constant 1.000000e+00 : f32
    %112 = vector.broadcast %cst_51 : f32 to vector<2x8xf32>
    %113 = arith.addf %112, %111 : vector<2x8xf32>
    %cst_52 = arith.constant 1.000000e+00 : f32
    %114 = vector.broadcast %cst_52 : f32 to vector<2x8xf32>
    %115 = arith.divf %114, %113 : vector<2x8xf32>
    %116 = arith.mulf %115, %2 : vector<2x8xf32>
    %c0_53 = arith.constant 0 : index
    %c0_54 = arith.constant 0 : index
    %117 = vector.load %arg12[%c0_53, %c0_54] : memref<2x8xf32, #tpu.memory_space<vmem>>, vector<2x8xf32>
    tpu.vector_store %arg12[%c0_53, %c0_54], %116 {strides = array<i32>} : memref<2x8xf32, #tpu.memory_space<vmem>>, vector<2x8xf32>,
    return
  }
}

</mosaic_0001>

<llo_original>
// kernel: tpu_custom_call.1
$region0: #{tpu_custom_call.1}
  #allocation0 [shape = 'u32[]', space=smem, size = 0x4, offset = 0x4, fixed_abs, tag = 'smem constant byte address 0x4 - core index']
  #allocation1 [shape = 'u32[144,128]{1,0:T(1,128)}', space=vmem, size = 0x12000, scoped, tag = 'internal scratch']
  #allocation2 [shape = 'f32[1,1]{1,0:T(1,128)S(1)}', space=vmem, size = 0x200, scoped, tag = 'scoped memory for tpu_custom_call.1']
  %s0 = inlined_call_operand.vmem [shape: f32[2,8,32], index: 0, kind: input, shape index: {}]
  %s1 = inlined_call_operand.vmem [shape: f32[16,16], index: 1, kind: input, shape index: {}]
  %s2 = inlined_call_operand.vmem [shape: f32[2,8], index: 2, kind: input, shape index: {}]
  %s3 = inlined_call_operand.vmem [shape: f32[32,128], index: 3, kind: input, shape index: {}]
  %s4 = inlined_call_operand.vmem [shape: f32[4,32], index: 4, kind: input, shape index: {}]
  %s5 = inlined_call_operand.vmem [shape: f32[4,32], index: 5, kind: input, shape index: {}]
  %s6 = inlined_call_operand.vmem [shape: f32[128,32], index: 6, kind: input, shape index: {}]
  %s7 = inlined_call_operand.vmem [shape: f32[1,32], index: 7, kind: input, shape index: {}]
  %s8 = inlined_call_operand.vmem [shape: f32[1,32], index: 8, kind: input, shape index: {}]
  %s9 = inlined_call_operand.vmem [shape: f32[1,32], index: 9, kind: input, shape index: {}]
  %s10 = inlined_call_operand.<no memory space> [shape: f32[1,1], index: 10, kind: input, shape index: {}]
  %s11 = inlined_call_operand.hbm [shape: f32[2,8,32], index: 11, kind: output, shape index: {0}]
  %s12 = inlined_call_operand.hbm [shape: f32[2,8], index: 12, kind: output, shape index: {1}]
  %13 = xla_tuple %s11, %s12
  %s14 = sld [smem:[#allocation0]]
  $region62: #{tpu_custom_call.1} parent=0
    _
  %s16 = ssub.s32 1, %s14
  %s17 = scalar_select 0, %s16, %s14
  %v18 = vstv %s10
  %19 = vst [vmem:[#allocation2] sm:$0x1] %v18
  $region1: #{tpu_custom_call.1} parent=0
    #allocation3 [shape = 'u8[8192]{0}', space=vmem, size = 0x2000, scoped, tag = 'output window, operand 0, single buffered']
    #allocation4 [shape = 's32[1]{0}', space=sflag, size = 0x4, scoped, tag = 'scoped memory for tpu_custom_call.1']
    #allocation5 [shape = 'u8[1024]{0}', space=vmem, size = 0x400, scoped, tag = 'output window, operand 1, single buffered']
    #allocation6 [shape = 's32[1]{0}', space=sflag, size = 0x4, scoped, tag = 'scoped memory for tpu_custom_call.1']
    %20 = vsyncpa [#allocation4], 0
    %21 = vsyncpa [#allocation6], 0
    // Predicated region
    $region2: #{tpu_custom_call.1} parent=1 // pred_check
      _
    $region3: #{tpu_custom_call.1} parent=1 // pred_check_branch
      %23 = sbr.rel (0) target = $region5
    $region4: #{tpu_custom_call.1} parent=1 // pred_region
      _
    $region5: #{tpu_custom_call.1} parent=1 // pred_fallthru
      _
    // Predicated region
    $region6: #{tpu_custom_call.1} parent=1 // pred_check
      _
    $region7: #{tpu_custom_call.1} parent=1 // pred_check_branch
      %25 = sbr.rel (0) target = $region9
    $region8: #{tpu_custom_call.1} parent=1 // pred_region
      _
    $region9: #{tpu_custom_call.1} parent=1 // pred_fallthru
      _
    // Predicated region
    $region10: #{tpu_custom_call.1} parent=1 // pred_check
      _
    $region11: #{tpu_custom_call.1} parent=1 // pred_check_branch
      %27 = sbr.rel (0) target = $region13
    $region12: #{tpu_custom_call.1} parent=1 // pred_region
      _
    $region13: #{tpu_custom_call.1} parent=1 // pred_fallthru
      _
    // Predicated region
    $region14: #{tpu_custom_call.1} parent=1 // pred_check
      _
    $region15: #{tpu_custom_call.1} parent=1 // pred_check_branch
      %29 = sbr.rel (0) target = $region17
    $region16: #{tpu_custom_call.1} parent=1 // pred_region
      _
    $region17: #{tpu_custom_call.1} parent=1 // pred_fallthru
      _
    // Predicated region
    $region18: #{tpu_custom_call.1} parent=1 // pred_check
      _
    $region19: #{tpu_custom_call.1} parent=1 // pred_check_branch
      %31 = sbr.rel (0) target = $region21
    $region20: #{tpu_custom_call.1} parent=1 // pred_region
      _
    $region21: #{tpu_custom_call.1} parent=1 // pred_fallthru
      _
    // Predicated region
    $region22: #{tpu_custom_call.1} parent=1 // pred_check
      _
    $region23: #{tpu_custom_call.1} parent=1 // pred_check_branch
      %33 = sbr.rel (0) target = $region25
    $region24: #{tpu_custom_call.1} parent=1 // pred_region
      _
    $region25: #{tpu_custom_call.1} parent=1 // pred_fallthru
      _
    // Predicated region
    $region26: #{tpu_custom_call.1} parent=1 // pred_check
      _
    $region27: #{tpu_custom_call.1} parent=1 // pred_check_branch
      %35 = sbr.rel (0) target = $region29
    $region28: #{tpu_custom_call.1} parent=1 // pred_region
      _
    $region29: #{tpu_custom_call.1} parent=1 // pred_fallthru
      _
    // Predicated region
    $region30: #{tpu_custom_call.1} parent=1 // pred_check
      _
    $region31: #{tpu_custom_call.1} parent=1 // pred_check_branch
      %37 = sbr.rel (0) target = $region33
    $region32: #{tpu_custom_call.1} parent=1 // pred_region
      _
    $region33: #{tpu_custom_call.1} parent=1 // pred_fallthru
      _
    // Predicated region
    $region34: #{tpu_custom_call.1} parent=1 // pred_check
      _
    $region35: #{tpu_custom_call.1} parent=1 // pred_check_branch
      %39 = sbr.rel (0) target = $region37
    $region36: #{tpu_custom_call.1} parent=1 // pred_region
      _
    $region37: #{tpu_custom_call.1} parent=1 // pred_fallthru
      _
    // Predicated region
    $region38: #{tpu_custom_call.1} parent=1 // pred_check
      _
    $region39: #{tpu_custom_call.1} parent=1 // pred_check_branch
      %41 = sbr.rel (0) target = $region41
    $region40: #{tpu_custom_call.1} parent=1 // pred_region
      _
    $region41: #{tpu_custom_call.1} parent=1 // pred_fallthru
      _
    // Predicated region
    $region42: #{tpu_custom_call.1} parent=1 // pred_check
      _
    $region43: #{tpu_custom_call.1} parent=1 // pred_check_branch
      %43 = sbr.rel (0) target = $region45
    $region44: #{tpu_custom_call.1} parent=1 // pred_region
      _
    $region45: #{tpu_custom_call.1} parent=1 // pred_fallthru
      _
    %v44 = vld [vmem:[%s0] sm:$0xff]
    %v45 = vld [vmem:[%s0 + $0x8] sm:$0xff]
    %v46 = vld [vmem:[%s2] sm:$0x3]
    %v47 = vld [vmem:[%s1] sm:$0xff]
    %v48 = vld [vmem:[%s1 + $0x8] sm:$0xff]
    %vm49 = vcmp.gt.f32.partialorder %v47, 0.0
    %vm50 = vcmp.gt.f32.partialorder %v48, 0.0
    %v51 = vsel %vm49, 0.0, -9e+15
    %v52 = vsel %vm50, 0.0, -9e+15
    %v53 = vld [vmem:[%s3] sm:$0xff]
    %v54 = vld [vmem:[%s3 + $0x8] sm:$0xff]
    %v55 = vld [vmem:[%s3 + $0x10] sm:$0xff]
    %v56 = vld [vmem:[%s3 + $0x18] sm:$0xff]
    %vm57 = vcmask 261120
    %v59 = vsel %vm57, %v44, 0
    %v62 = vsel %vm57, %v45, 0
    %64 = vmatprep.subr.mxu0 0.0
    %65 = vmatpush1.msra.mxu0 0.0
    %66 = vmatprep.subr.mxu0 0.0
    %67 = vmatpush1.msra.mxu0 0.0
    %68 = vmatprep.subr.mxu0 0.0
    %69 = vmatpush1.msra.mxu0 0.0
    %70 = vmatprep.subr.mxu0 0.0
    %71 = vmatpush1.msra.mxu0 0.0
    %72 = vmatprep.subr.mxu0 0.0
    %73 = vmatpush1.msra.mxu0 0.0
    %74 = vmatprep.subr.mxu0 0.0
    %75 = vmatpush1.msra.mxu0 0.0
    %76 = vmatprep.subr.mxu0 0.0
    %77 = vmatpush1.msra.mxu0 0.0
    %78 = vmatprep.subr.mxu0 0.0
    %79 = vmatpush1.msra.mxu0 0.0
    %80 = vmatprep.subr.mxu0 0.0
    %81 = vmatpush1.msra.mxu0 0.0
    %82 = vmatprep.subr.mxu0 0.0
    %83 = vmatpush1.msra.mxu0 0.0
    %84 = vmatprep.subr.mxu0 0.0
    %85 = vmatpush1.msra.mxu0 0.0
    %86 = vmatprep.subr.mxu0 0.0
    %87 = vmatpush1.msra.mxu0 0.0
    %88 = vmatprep.subr.mxu0 0.0
    %89 = vmatpush1.msra.mxu0 %v56
    %90 = vmatprep.subr.mxu0 0.0
    %91 = vmatpush1.msra.mxu0 %v55
    %92 = vmatprep.subr.mxu0 0.0
    %93 = vmatpush1.msra.mxu0 %v54
    %94 = vmatprep.subr.mxu0 0.0
    %95 = vmatpush1.msra.mxu0 %v53
    %96 = vmatprep.subr.mxu0 0.0
    %97 = vmatpush2.msra.mxu0 0.0
    %98 = vmatprep.subr.mxu0 0.0
    %99 = vmatpush2.msra.mxu0 0.0
    %100 = vmatprep.subr.mxu0 0.0
    %101 = vmatpush2.msra.mxu0 0.0
    %102 = vmatprep.subr.mxu0 0.0
    %103 = vmatpush2.msra.mxu0 0.0
    %104 = vmatprep.subr.mxu0 0.0
    %105 = vmatpush2.msra.mxu0 0.0
    %106 = vmatprep.subr.mxu0 0.0
    %107 = vmatpush2.msra.mxu0 0.0
    %108 = vmatprep.subr.mxu0 0.0
    %109 = vmatpush2.msra.mxu0 0.0
    %110 = vmatprep.subr.mxu0 0.0
    %111 = vmatpush2.msra.mxu0 0.0
    %112 = vmatprep.subr.mxu0 0.0
    %113 = vmatpush2.msra.mxu0 0.0
    %114 = vmatprep.subr.mxu0 0.0
    %115 = vmatpush2.msra.mxu0 0.0
    %116 = vmatprep.subr.mxu0 0.0
    %117 = vmatpush2.msra.mxu0 0.0
    %118 = vmatprep.subr.mxu0 0.0
    %119 = vmatpush2.msra.mxu0 0.0
    %120 = vmatprep.subr.mxu0 0.0
    %121 = vmatpush2.msra.mxu0 0.0
    %122 = vmatprep.subr.mxu0 0.0
    %123 = vmatpush2.msra.mxu0 0.0
    %124 = vmatprep.subr.mxu0 0.0
    %125 = vmatpush2.msra.mxu0 0.0
    %126 = vmatprep.subr.mxu0 0.0
    %127 = vmatpush2.msra.mxu0 0.0
    %128 = vmatprep.mubr.f32.mxu0 0.0
    %129 = vmatmul.mubr.f32.gmra.mxu0 %v59
    %v130 = vpop.f32.mrf.mxu0
    %v131 = vadd.f32 0.0, %v130
    %v132 = vpop.f32.mrf.mxu0
    %133 = vmatprep.mubr.f32.mxu0 0.0
    %134 = vmatmul.mubr.f32.gmra.mxu0 %v62
    %v135 = vpop.f32.mrf.mxu0
    %v136 = vadd.f32 0.0, %v135
    %v137 = vpop.f32.mrf.mxu0
    %138 = vdwg.mxu0
    %139 = vxpose.xlu0.b32.start [1/16] %v131, 128
    %140 = vxpose.xlu0.b32.cont [2/16] %v136, 128
    %141 = vxpose.xlu0.b32.cont [3/16] 0.0, 128
    %142 = vxpose.xlu0.b32.cont [4/16] 0.0, 128
    %143 = vxpose.xlu0.b32.cont [5/16] 0.0, 128
    %144 = vxpose.xlu0.b32.cont [6/16] 0.0, 128
    %145 = vxpose.xlu0.b32.cont [7/16] 0.0, 128
    %146 = vxpose.xlu0.b32.cont [8/16] 0.0, 128
    %147 = vxpose.xlu0.b32.cont [9/16] 0.0, 128
    %148 = vxpose.xlu0.b32.cont [10/16] 0.0, 128
    %149 = vxpose.xlu0.b32.cont [11/16] 0.0, 128
    %150 = vxpose.xlu0.b32.cont [12/16] 0.0, 128
    %151 = vxpose.xlu0.b32.cont [13/16] 0.0, 128
    %152 = vxpose.xlu0.b32.cont [14/16] 0.0, 128
    %153 = vxpose.xlu0.b32.cont [15/16] 0.0, 128
    %154 = vxpose.xlu0.b32.end [16/16] 0.0, 128
    %v155 = vpop.trf.xlu0
    %v156 = vpop.trf.xlu0
    %v157 = vpop.trf.xlu0
    %v158 = vpop.trf.xlu0
    %v159 = vpop.trf.xlu0
    %v160 = vpop.trf.xlu0
    %v161 = vpop.trf.xlu0
    %v162 = vpop.trf.xlu0
    %v163 = vpop.trf.xlu0
    %v164 = vpop.trf.xlu0
    %v165 = vpop.trf.xlu0
    %v166 = vpop.trf.xlu0
    %v167 = vpop.trf.xlu0
    %v168 = vpop.trf.xlu0
    %v169 = vpop.trf.xlu0
    %v170 = vpop.trf.xlu0
    %171 = vxpose.xlu0.b32.start [1/16] %v155, 128
    %172 = vxpose.xlu0.b32.cont [2/16] %v156, 128
    %173 = vxpose.xlu0.b32.cont [3/16] %v157, 128
    %174 = vxpose.xlu0.b32.cont [4/16] %v158, 128
    %175 = vxpose.xlu0.b32.cont [5/16] 0.0, 128
    %176 = vxpose.xlu0.b32.cont [6/16] 0.0, 128
    %177 = vxpose.xlu0.b32.cont [7/16] 0.0, 128
    %178 = vxpose.xlu0.b32.cont [8/16] 0.0, 128
    %179 = vxpose.xlu0.b32.cont [9/16] 0.0, 128
    %180 = vxpose.xlu0.b32.cont [10/16] 0.0, 128
    %181 = vxpose.xlu0.b32.cont [11/16] 0.0, 128
    %182 = vxpose.xlu0.b32.cont [12/16] 0.0, 128
    %183 = vxpose.xlu0.b32.cont [13/16] 0.0, 128
    %184 = vxpose.xlu0.b32.cont [14/16] 0.0, 128
    %185 = vxpose.xlu0.b32.cont [15/16] 0.0, 128
    %186 = vxpose.xlu0.b32.end [16/16] 0.0, 128
    %v187 = vpop.trf.xlu0
    %v188 = vpop.trf.xlu0
    %v189 = vpop.trf.xlu0
    %v190 = vpop.trf.xlu0
    %v191 = vpop.trf.xlu0
    %v192 = vpop.trf.xlu0
    %v193 = vpop.trf.xlu0
    %v194 = vpop.trf.xlu0
    %v195 = vpop.trf.xlu0
    %v196 = vpop.trf.xlu0
    %v197 = vpop.trf.xlu0
    %v198 = vpop.trf.xlu0
    %v199 = vpop.trf.xlu0
    %v200 = vpop.trf.xlu0
    %v201 = vpop.trf.xlu0
    %v202 = vpop.trf.xlu0
    %203 = vxpose.xlu0.b32.start [1/16] %v159, 128
    %204 = vxpose.xlu0.b32.cont [2/16] %v160, 128
    %205 = vxpose.xlu0.b32.cont [3/16] %v161, 128
    %206 = vxpose.xlu0.b32.cont [4/16] %v162, 128
    %207 = vxpose.xlu0.b32.cont [5/16] 0.0, 128
    %208 = vxpose.xlu0.b32.cont [6/16] 0.0, 128
    %209 = vxpose.xlu0.b32.cont [7/16] 0.0, 128
    %210 = vxpose.xlu0.b32.cont [8/16] 0.0, 128
    %211 = vxpose.xlu0.b32.cont [9/16] 0.0, 128
    %212 = vxpose.xlu0.b32.cont [10/16] 0.0, 128
    %213 = vxpose.xlu0.b32.cont [11/16] 0.0, 128
    %214 = vxpose.xlu0.b32.cont [12/16] 0.0, 128
    %215 = vxpose.xlu0.b32.cont [13/16] 0.0, 128
    %216 = vxpose.xlu0.b32.cont [14/16] 0.0, 128
    %217 = vxpose.xlu0.b32.cont [15/16] 0.0, 128
    %218 = vxpose.xlu0.b32.end [16/16] 0.0, 128
    %v219 = vpop.trf.xlu0
    %v220 = vpop.trf.xlu0
    %v221 = vpop.trf.xlu0
    %v222 = vpop.trf.xlu0
    %v223 = vpop.trf.xlu0
    %v224 = vpop.trf.xlu0
    %v225 = vpop.trf.xlu0
    %v226 = vpop.trf.xlu0
    %v227 = vpop.trf.xlu0
    %v228 = vpop.trf.xlu0
    %v229 = vpop.trf.xlu0
    %v230 = vpop.trf.xlu0
    %v231 = vpop.trf.xlu0
    %v232 = vpop.trf.xlu0
    %v233 = vpop.trf.xlu0
    %v234 = vpop.trf.xlu0
    %235 = vxpose.xlu0.b32.start [1/16] %v163, 128
    %236 = vxpose.xlu0.b32.cont [2/16] %v164, 128
    %237 = vxpose.xlu0.b32.cont [3/16] %v165, 128
    %238 = vxpose.xlu0.b32.cont [4/16] %v166, 128
    %239 = vxpose.xlu0.b32.cont [5/16] 0.0, 128
    %240 = vxpose.xlu0.b32.cont [6/16] 0.0, 128
    %241 = vxpose.xlu0.b32.cont [7/16] 0.0, 128
    %242 = vxpose.xlu0.b32.cont [8/16] 0.0, 128
    %243 = vxpose.xlu0.b32.cont [9/16] 0.0, 128
    %244 = vxpose.xlu0.b32.cont [10/16] 0.0, 128
    %245 = vxpose.xlu0.b32.cont [11/16] 0.0, 128
    %246 = vxpose.xlu0.b32.cont [12/16] 0.0, 128
    %247 = vxpose.xlu0.b32.cont [13/16] 0.0, 128
    %248 = vxpose.xlu0.b32.cont [14/16] 0.0, 128
    %249 = vxpose.xlu0.b32.cont [15/16] 0.0, 128
    %250 = vxpose.xlu0.b32.end [16/16] 0.0, 128
    %v251 = vpop.trf.xlu0
    %v252 = vpop.trf.xlu0
    %v253 = vpop.trf.xlu0
    %v254 = vpop.trf.xlu0
    %v255 = vpop.trf.xlu0
    %v256 = vpop.trf.xlu0
    %v257 = vpop.trf.xlu0
    %v258 = vpop.trf.xlu0
    %v259 = vpop.trf.xlu0
    %v260 = vpop.trf.xlu0
    %v261 = vpop.trf.xlu0
    %v262 = vpop.trf.xlu0
    %v263 = vpop.trf.xlu0
    %v264 = vpop.trf.xlu0
    %v265 = vpop.trf.xlu0
    %v266 = vpop.trf.xlu0
    %267 = vxpose.xlu0.b32.start [1/16] %v167, 128
    %268 = vxpose.xlu0.b32.cont [2/16] %v168, 128
    %269 = vxpose.xlu0.b32.cont [3/16] %v169, 128
    %270 = vxpose.xlu0.b32.cont [4/16] %v170, 128
    %271 = vxpose.xlu0.b32.cont [5/16] 0.0, 128
    %272 = vxpose.xlu0.b32.cont [6/16] 0.0, 128
    %273 = vxpose.xlu0.b32.cont [7/16] 0.0, 128
    %274 = vxpose.xlu0.b32.cont [8/16] 0.0, 128
    %275 = vxpose.xlu0.b32.cont [9/16] 0.0, 128
    %276 = vxpose.xlu0.b32.cont [10/16] 0.0, 128
    %277 = vxpose.xlu0.b32.cont [11/16] 0.0, 128
    %278 = vxpose.xlu0.b32.cont [12/16] 0.0, 128
    %279 = vxpose.xlu0.b32.cont [13/16] 0.0, 128
    %280 = vxpose.xlu0.b32.cont [14/16] 0.0, 128
    %281 = vxpose.xlu0.b32.cont [15/16] 0.0, 128
    %282 = vxpose.xlu0.b32.end [16/16] 0.0, 128
    %v283 = vpop.trf.xlu0
    %v284 = vpop.trf.xlu0
    %v285 = vpop.trf.xlu0
    %v286 = vpop.trf.xlu0
    %v287 = vpop.trf.xlu0
    %v288 = vpop.trf.xlu0
    %v289 = vpop.trf.xlu0
    %v290 = vpop.trf.xlu0
    %v291 = vpop.trf.xlu0
    %v292 = vpop.trf.xlu0
    %v293 = vpop.trf.xlu0
    %v294 = vpop.trf.xlu0
    %v295 = vpop.trf.xlu0
    %v296 = vpop.trf.xlu0
    %v297 = vpop.trf.xlu0
    %v298 = vpop.trf.xlu0
    %v299 = vld [vmem:[%s4] sm:$0xf]
    %v300 = vld [vmem:[%s5] sm:$0xf]
    %v303 = vunpack.c.l.s4 1966171168
    %v304 = vunpack.c.0.s8 %v303
    %v305 = vlaneseq
    %v306 = vshrl.u32 %v305, 7
    %v307 = vsub.s32 %v304, %v306
    %v308 = vrot.slane %v299, %v307
    %v309 = vcombine.high %v308, %v308
    %v311 = vunpack.c.l.s4 1966171168
    %v312 = vunpack.c.0.s8 %v311
    %v313 = vlaneseq
    %v314 = vshrl.u32 %v313, 7
    %v315 = vsub.s32 %v312, %v314
    %v316 = vrot.slane %v308, %v315
    %v318 = vunpack.c.l.s4 1966171168
    %v319 = vunpack.c.0.s8 %v318
    %v320 = vlaneseq
    %v321 = vshrl.u32 %v320, 7
    %v322 = vsub.s32 %v319, %v321
    %v323 = vrot.slane %v309, %v322
    %v324 = vcombine.high %v316, %v316
    %v325 = vcombine.high %v323, %v323
    %v326 = vlaneseq
    %v327 = vshrl.u32 %v326, 7
    %v328 = vsub.s32 0, %v327
    %v329 = vrot.slane %v316, %v328
    %v330 = vlaneseq
    %v331 = vshrl.u32 %v330, 7
    %v332 = vsub.s32 0, %v331
    %v333 = vrot.slane %v323, %v332
    %v334 = vlaneseq
    %v335 = vshrl.u32 %v334, 7
    %v336 = vsub.s32 0, %v335
    %v337 = vrot.slane %v324, %v336
    %v338 = vlaneseq
    %v339 = vshrl.u32 %v338, 7
    %v340 = vsub.s32 0, %v339
    %v341 = vrot.slane %v325, %v340
    %v346 = vmul.f32 %v187, %v329
    %v347 = vmul.f32 %v188, %v329
    %v348 = vmul.f32 %v219, %v333
    %v349 = vmul.f32 %v220, %v333
    %v350 = vmul.f32 %v251, %v337
    %v351 = vmul.f32 %v252, %v337
    %v352 = vmul.f32 %v283, %v341
    %v353 = vmul.f32 %v284, %v341
    %v354 = vsel %vm57, %v346, 0.0
    %355 = vadd.xlane.f32.xlu0 %v354
    %v356 = vpop.xlane.xlu0 %355
    %v357 = vsel %vm57, %v347, 0.0
    %358 = vadd.xlane.f32.xlu0 %v357
    %v359 = vpop.xlane.xlu0 %358
    %v360 = vsel %vm57, %v348, 0.0
    %361 = vadd.xlane.f32.xlu0 %v360
    %v362 = vpop.xlane.xlu0 %361
    %v363 = vsel %vm57, %v349, 0.0
    %364 = vadd.xlane.f32.xlu0 %v363
    %v365 = vpop.xlane.xlu0 %364
    %v366 = vsel %vm57, %v350, 0.0
    %367 = vadd.xlane.f32.xlu0 %v366
    %v368 = vpop.xlane.xlu0 %367
    %v369 = vsel %vm57, %v351, 0.0
    %370 = vadd.xlane.f32.xlu0 %v369
    %v371 = vpop.xlane.xlu0 %370
    %v372 = vsel %vm57, %v352, 0.0
    %373 = vadd.xlane.f32.xlu0 %v372
    %v374 = vpop.xlane.xlu0 %373
    %v375 = vsel %vm57, %v353, 0.0
    %376 = vadd.xlane.f32.xlu0 %v375
    %v377 = vpop.xlane.xlu0 %376
    %v380 = vunpack.c.l.s4 1966171168
    %v381 = vunpack.c.0.s8 %v380
    %v382 = vlaneseq
    %v383 = vshrl.u32 %v382, 7
    %v384 = vsub.s32 %v381, %v383
    %v385 = vrot.slane %v300, %v384
    %v386 = vcombine.high %v385, %v385
    %v388 = vunpack.c.l.s4 1966171168
    %v389 = vunpack.c.0.s8 %v388
    %v390 = vlaneseq
    %v391 = vshrl.u32 %v390, 7
    %v392 = vsub.s32 %v389, %v391
    %v393 = vrot.slane %v385, %v392
    %v395 = vunpack.c.l.s4 1966171168
    %v396 = vunpack.c.0.s8 %v395
    %v397 = vlaneseq
    %v398 = vshrl.u32 %v397, 7
    %v399 = vsub.s32 %v396, %v398
    %v400 = vrot.slane %v386, %v399
    %v401 = vcombine.high %v393, %v393
    %v402 = vcombine.high %v400, %v400
    %v403 = vlaneseq
    %v404 = vshrl.u32 %v403, 7
    %v405 = vsub.s32 0, %v404
    %v406 = vrot.slane %v393, %v405
    %v407 = vlaneseq
    %v408 = vshrl.u32 %v407, 7
    %v409 = vsub.s32 0, %v408
    %v410 = vrot.slane %v400, %v409
    %v411 = vlaneseq
    %v412 = vshrl.u32 %v411, 7
    %v413 = vsub.s32 0, %v412
    %v414 = vrot.slane %v401, %v413
    %v415 = vlaneseq
    %v416 = vshrl.u32 %v415, 7
    %v417 = vsub.s32 0, %v416
    %v418 = vrot.slane %v402, %v417
    %v423 = vmul.f32 %v187, %v406
    %v424 = vmul.f32 %v188, %v406
    %v425 = vmul.f32 %v219, %v410
    %v426 = vmul.f32 %v220, %v410
    %v427 = vmul.f32 %v251, %v414
    %v428 = vmul.f32 %v252, %v414
    %v429 = vmul.f32 %v283, %v418
    %v430 = vmul.f32 %v284, %v418
    %v431 = vsel %vm57, %v423, 0.0
    %432 = vadd.xlane.f32.xlu0 %v431
    %v433 = vpop.xlane.xlu0 %432
    %v434 = vsel %vm57, %v424, 0.0
    %435 = vadd.xlane.f32.xlu0 %v434
    %v436 = vpop.xlane.xlu0 %435
    %v437 = vsel %vm57, %v425, 0.0
    %438 = vadd.xlane.f32.xlu0 %v437
    %v439 = vpop.xlane.xlu0 %438
    %v440 = vsel %vm57, %v426, 0.0
    %441 = vadd.xlane.f32.xlu0 %v440
    %v442 = vpop.xlane.xlu0 %441
    %v443 = vsel %vm57, %v427, 0.0
    %444 = vadd.xlane.f32.xlu0 %v443
    %v445 = vpop.xlane.xlu0 %444
    %v446 = vsel %vm57, %v428, 0.0
    %447 = vadd.xlane.f32.xlu0 %v446
    %v448 = vpop.xlane.xlu0 %447
    %v449 = vsel %vm57, %v429, 0.0
    %450 = vadd.xlane.f32.xlu0 %v449
    %v451 = vpop.xlane.xlu0 %450
    %v452 = vsel %vm57, %v430, 0.0
    %453 = vadd.xlane.f32.xlu0 %v452
    %v454 = vpop.xlane.xlu0 %453
    %v463 = vlaneseq
    %v464 = vand.u32 %v463, 127
    %v465 = vlaneseq
    %v466 = vshrl.u32 %v465, 7
    %v467 = vsub.s32 %v464, %v466
    %v468 = vrot.slane %v433, %v467
    %v469 = vadd.s32 %v464, 4294967288
    %v470 = vlaneseq
    %v471 = vshrl.u32 %v470, 7
    %v472 = vsub.s32 %v469, %v471
    %v473 = vrot.slane %v436, %v472
    %vm474 = vcmask 130112
    %v475 = vsel %vm474, %v473, %v468
    %v476 = vlaneseq
    %v477 = vshrl.u32 %v476, 7
    %v478 = vsub.s32 %v464, %v477
    %v479 = vrot.slane %v439, %v478
    %v480 = vlaneseq
    %v481 = vshrl.u32 %v480, 7
    %v482 = vsub.s32 %v469, %v481
    %v483 = vrot.slane %v442, %v482
    %v484 = vsel %vm474, %v483, %v479
    %v485 = vlaneseq
    %v486 = vshrl.u32 %v485, 7
    %v487 = vsub.s32 %v464, %v486
    %v488 = vrot.slane %v445, %v487
    %v489 = vlaneseq
    %v490 = vshrl.u32 %v489, 7
    %v491 = vsub.s32 %v469, %v490
    %v492 = vrot.slane %v448, %v491
    %v493 = vsel %vm474, %v492, %v488
    %v494 = vlaneseq
    %v495 = vshrl.u32 %v494, 7
    %v496 = vsub.s32 %v464, %v495
    %v497 = vrot.slane %v451, %v496
    %v498 = vlaneseq
    %v499 = vshrl.u32 %v498, 7
    %v500 = vsub.s32 %v469, %v499
    %v501 = vrot.slane %v454, %v500
    %v502 = vsel %vm474, %v501, %v497
    %vm503 = vcmask 1041409
    %vm504 = vcmask 1042434
    %v505 = vsel %vm504, %v475, %v475
    %vm506 = vcmask 1043459
    %v507 = vsel %vm506, %v475, %v505
    %vm508 = vcmask 1044484
    %v509 = vsel %vm508, %v475, %v507
    %vm510 = vcmask 1045509
    %v511 = vsel %vm510, %v475, %v509
    %vm512 = vcmask 1046534
    %v513 = vsel %vm512, %v475, %v511
    %vm514 = vcmask 1047559
    %v515 = vsel %vm514, %v475, %v513
    %v516 = vsel %vm504, %v484, %v484
    %v517 = vsel %vm506, %v484, %v516
    %v518 = vsel %vm508, %v484, %v517
    %v519 = vsel %vm510, %v484, %v518
    %v520 = vsel %vm512, %v484, %v519
    %v521 = vsel %vm514, %v484, %v520
    %v522 = vsel %vm504, %v493, %v493
    %v523 = vsel %vm506, %v493, %v522
    %v524 = vsel %vm508, %v493, %v523
    %v525 = vsel %vm510, %v493, %v524
    %v526 = vsel %vm512, %v493, %v525
    %v527 = vsel %vm514, %v493, %v526
    %v528 = vsel %vm504, %v502, %v502
    %v529 = vsel %vm506, %v502, %v528
    %v530 = vsel %vm508, %v502, %v529
    %v531 = vsel %vm510, %v502, %v530
    %v532 = vsel %vm512, %v502, %v531
    %v533 = vsel %vm514, %v502, %v532
    %v538 = vadd.f32 %v356, %v515
    %v539 = vadd.f32 %v359, %v515
    %v540 = vadd.f32 %v362, %v521
    %v541 = vadd.f32 %v365, %v521
    %v542 = vadd.f32 %v368, %v527
    %v543 = vadd.f32 %v371, %v527
    %v544 = vadd.f32 %v374, %v533
    %v545 = vadd.f32 %v377, %v533
    %vm546 = vcmp.gt.f32.partialorder %v538, 0.0
    %vm547 = vcmp.gt.f32.partialorder %v539, 0.0
    %vm548 = vcmp.gt.f32.partialorder %v540, 0.0
    %vm549 = vcmp.gt.f32.partialorder %v541, 0.0
    %vm550 = vcmp.gt.f32.partialorder %v542, 0.0
    %vm551 = vcmp.gt.f32.partialorder %v543, 0.0
    %vm552 = vcmp.gt.f32.partialorder %v544, 0.0
    %vm553 = vcmp.gt.f32.partialorder %v545, 0.0
    %v554 = vmul.f32 %v538, 0.2
    %v555 = vmul.f32 %v539, 0.2
    %v556 = vmul.f32 %v540, 0.2
    %v557 = vmul.f32 %v541, 0.2
    %v558 = vmul.f32 %v542, 0.2
    %v559 = vmul.f32 %v543, 0.2
    %v560 = vmul.f32 %v544, 0.2
    %v561 = vmul.f32 %v545, 0.2
    %v562 = vsel %vm546, %v538, %v554
    %v563 = vsel %vm547, %v539, %v555
    %v564 = vsel %vm548, %v540, %v556
    %v565 = vsel %vm549, %v541, %v557
    %v566 = vsel %vm550, %v542, %v558
    %v567 = vsel %vm551, %v543, %v559
    %v568 = vsel %vm552, %v544, %v560
    %v569 = vsel %vm553, %v545, %v561
    %v570 = vadd.f32 %v562, %v51
    %v571 = vadd.f32 %v563, %v52
    %v572 = vadd.f32 %v564, %v51
    %v573 = vadd.f32 %v565, %v52
    %v574 = vadd.f32 %v566, %v51
    %v575 = vadd.f32 %v567, %v52
    %v576 = vadd.f32 %v568, %v51
    %v577 = vadd.f32 %v569, %v52
    %vm578 = vcmask 130048
    %v579 = vsel %vm578, %v570, -inf
    %580 = vmax.xlane.f32.xlu0 %v579
    %v581 = vpop.xlane.xlu0 %580
    %v582 = vsel %vm578, %v571, -inf
    %583 = vmax.xlane.f32.xlu0 %v582
    %v584 = vpop.xlane.xlu0 %583
    %v585 = vsel %vm578, %v572, -inf
    %586 = vmax.xlane.f32.xlu0 %v585
    %v587 = vpop.xlane.xlu0 %586
    %v588 = vsel %vm578, %v573, -inf
    %589 = vmax.xlane.f32.xlu0 %v588
    %v590 = vpop.xlane.xlu0 %589
    %v591 = vsel %vm578, %v574, -inf
    %592 = vmax.xlane.f32.xlu0 %v591
    %v593 = vpop.xlane.xlu0 %592
    %v594 = vsel %vm578, %v575, -inf
    %595 = vmax.xlane.f32.xlu0 %v594
    %v596 = vpop.xlane.xlu0 %595
    %v597 = vsel %vm578, %v576, -inf
    %598 = vmax.xlane.f32.xlu0 %v597
    %v599 = vpop.xlane.xlu0 %598
    %v600 = vsel %vm578, %v577, -inf
    %601 = vmax.xlane.f32.xlu0 %v600
    %v602 = vpop.xlane.xlu0 %601
    %v603 = vsub.f32 %v570, %v581
    %v604 = vsub.f32 %v571, %v584
    %v605 = vsub.f32 %v572, %v587
    %v606 = vsub.f32 %v573, %v590
    %v607 = vsub.f32 %v574, %v593
    %v608 = vsub.f32 %v575, %v596
    %v609 = vsub.f32 %v576, %v599
    %v610 = vsub.f32 %v577, %v602
    %v611 = vmul.f32 %v603, 1.442695
    %v612 = vpow.pop %v611
    %v613 = vmul.f32 %v604, 1.442695
    %v614 = vpow.pop %v613
    %v615 = vmul.f32 %v605, 1.442695
    %v616 = vpow.pop %v615
    %v617 = vmul.f32 %v606, 1.442695
    %v618 = vpow.pop %v617
    %v619 = vmul.f32 %v607, 1.442695
    %v620 = vpow.pop %v619
    %v621 = vmul.f32 %v608, 1.442695
    %v622 = vpow.pop %v621
    %v623 = vmul.f32 %v609, 1.442695
    %v624 = vpow.pop %v623
    %v625 = vmul.f32 %v610, 1.442695
    %v626 = vpow.pop %v625
    %v627 = vsel %vm578, %v612, 0.0
    %628 = vadd.xlane.f32.xlu0 %v627
    %v629 = vpop.xlane.xlu0 %628
    %v630 = vsel %vm578, %v614, 0.0
    %631 = vadd.xlane.f32.xlu0 %v630
    %v632 = vpop.xlane.xlu0 %631
    %v633 = vsel %vm578, %v616, 0.0
    %634 = vadd.xlane.f32.xlu0 %v633
    %v635 = vpop.xlane.xlu0 %634
    %v636 = vsel %vm578, %v618, 0.0
    %637 = vadd.xlane.f32.xlu0 %v636
    %v638 = vpop.xlane.xlu0 %637
    %v639 = vsel %vm578, %v620, 0.0
    %640 = vadd.xlane.f32.xlu0 %v639
    %v641 = vpop.xlane.xlu0 %640
    %v642 = vsel %vm578, %v622, 0.0
    %643 = vadd.xlane.f32.xlu0 %v642
    %v644 = vpop.xlane.xlu0 %643
    %v645 = vsel %vm578, %v624, 0.0
    %646 = vadd.xlane.f32.xlu0 %v645
    %v647 = vpop.xlane.xlu0 %646
    %v648 = vsel %vm578, %v626, 0.0
    %649 = vadd.xlane.f32.xlu0 %v648
    %v650 = vpop.xlane.xlu0 %649
    %v651 = vrcp.pop %v629
    %v652 = vmul.f32 %v612, %v651
    %v653 = vrcp.pop %v632
    %v654 = vmul.f32 %v614, %v653
    %v655 = vrcp.pop %v635
    %v656 = vmul.f32 %v616, %v655
    %v657 = vrcp.pop %v638
    %v658 = vmul.f32 %v618, %v657
    %v659 = vrcp.pop %v641
    %v660 = vmul.f32 %v620, %v659
    %v661 = vrcp.pop %v644
    %v662 = vmul.f32 %v622, %v661
    %v663 = vrcp.pop %v647
    %v664 = vmul.f32 %v624, %v663
    %v665 = vrcp.pop %v650
    %v666 = vmul.f32 %v626, %v665
    %v668 = vsel %vm578, %v652, 0
    %v671 = vsel %vm578, %v654, 0
    %673 = vmatprep.subr.mxu0 0.0
    %674 = vmatpush1.msra.mxu0 0.0
    %675 = vmatprep.subr.mxu0 0.0
    %676 = vmatpush1.msra.mxu0 0.0
    %677 = vmatprep.subr.mxu0 0.0
    %678 = vmatpush1.msra.mxu0 0.0
    %679 = vmatprep.subr.mxu0 0.0
    %680 = vmatpush1.msra.mxu0 0.0
    %681 = vmatprep.subr.mxu0 0.0
    %682 = vmatpush1.msra.mxu0 0.0
    %683 = vmatprep.subr.mxu0 0.0
    %684 = vmatpush1.msra.mxu0 0.0
    %685 = vmatprep.subr.mxu0 0.0
    %686 = vmatpush1.msra.mxu0 0.0
    %687 = vmatprep.subr.mxu0 0.0
    %688 = vmatpush1.msra.mxu0 0.0
    %689 = vmatprep.subr.mxu0 0.0
    %690 = vmatpush1.msra.mxu0 0.0
    %691 = vmatprep.subr.mxu0 0.0
    %692 = vmatpush1.msra.mxu0 0.0
    %693 = vmatprep.subr.mxu0 0.0
    %694 = vmatpush1.msra.mxu0 0.0
    %695 = vmatprep.subr.mxu0 0.0
    %696 = vmatpush1.msra.mxu0 0.0
    %697 = vmatprep.subr.mxu0 0.0
    %698 = vmatpush1.msra.mxu0 0.0
    %699 = vmatprep.subr.mxu0 0.0
    %700 = vmatpush1.msra.mxu0 0.0
    %701 = vmatprep.subr.mxu0 0.0
    %702 = vmatpush1.msra.mxu0 %v188
    %703 = vmatprep.subr.mxu0 0.0
    %704 = vmatpush1.msra.mxu0 %v187
    %705 = vmatprep.subr.mxu0 0.0
    %706 = vmatpush2.msra.mxu0 0.0
    %707 = vmatprep.subr.mxu0 0.0
    %708 = vmatpush2.msra.mxu0 0.0
    %709 = vmatprep.subr.mxu0 0.0
    %710 = vmatpush2.msra.mxu0 0.0
    %711 = vmatprep.subr.mxu0 0.0
    %712 = vmatpush2.msra.mxu0 0.0
    %713 = vmatprep.subr.mxu0 0.0
    %714 = vmatpush2.msra.mxu0 0.0
    %715 = vmatprep.subr.mxu0 0.0
    %716 = vmatpush2.msra.mxu0 0.0
    %717 = vmatprep.subr.mxu0 0.0
    %718 = vmatpush2.msra.mxu0 0.0
    %719 = vmatprep.subr.mxu0 0.0
    %720 = vmatpush2.msra.mxu0 0.0
    %721 = vmatprep.subr.mxu0 0.0
    %722 = vmatpush2.msra.mxu0 0.0
    %723 = vmatprep.subr.mxu0 0.0
    %724 = vmatpush2.msra.mxu0 0.0
    %725 = vmatprep.subr.mxu0 0.0
    %726 = vmatpush2.msra.mxu0 0.0
    %727 = vmatprep.subr.mxu0 0.0
    %728 = vmatpush2.msra.mxu0 0.0
    %729 = vmatprep.subr.mxu0 0.0
    %730 = vmatpush2.msra.mxu0 0.0
    %731 = vmatprep.subr.mxu0 0.0
    %732 = vmatpush2.msra.mxu0 0.0
    %733 = vmatprep.subr.mxu0 0.0
    %734 = vmatpush2.msra.mxu0 0.0
    %735 = vmatprep.subr.mxu0 0.0
    %736 = vmatpush2.msra.mxu0 0.0
    %737 = vmatprep.mubr.f32.mxu0 0.0
    %738 = vmatmul.mubr.f32.gmra.mxu0 %v668
    %v739 = vpop.f32.mrf.mxu0
    %v740 = vadd.f32 0.0, %v739
    %v741 = vpop.f32.mrf.mxu0
    %742 = vmatprep.mubr.f32.mxu0 0.0
    %743 = vmatmul.mubr.f32.gmra.mxu0 %v671
    %v744 = vpop.f32.mrf.mxu0
    %v745 = vadd.f32 0.0, %v744
    %v746 = vpop.f32.mrf.mxu0
    %747 = vdwg.mxu0
    %v749 = vsel %vm578, %v656, 0
    %v752 = vsel %vm578, %v658, 0
    %754 = vmatprep.subr.mxu0 0.0
    %755 = vmatpush1.msra.mxu0 0.0
    %756 = vmatprep.subr.mxu0 0.0
    %757 = vmatpush1.msra.mxu0 0.0
    %758 = vmatprep.subr.mxu0 0.0
    %759 = vmatpush1.msra.mxu0 0.0
    %760 = vmatprep.subr.mxu0 0.0
    %761 = vmatpush1.msra.mxu0 0.0
    %762 = vmatprep.subr.mxu0 0.0
    %763 = vmatpush1.msra.mxu0 0.0
    %764 = vmatprep.subr.mxu0 0.0
    %765 = vmatpush1.msra.mxu0 0.0
    %766 = vmatprep.subr.mxu0 0.0
    %767 = vmatpush1.msra.mxu0 0.0
    %768 = vmatprep.subr.mxu0 0.0
    %769 = vmatpush1.msra.mxu0 0.0
    %770 = vmatprep.subr.mxu0 0.0
    %771 = vmatpush1.msra.mxu0 0.0
    %772 = vmatprep.subr.mxu0 0.0
    %773 = vmatpush1.msra.mxu0 0.0
    %774 = vmatprep.subr.mxu0 0.0
    %775 = vmatpush1.msra.mxu0 0.0
    %776 = vmatprep.subr.mxu0 0.0
    %777 = vmatpush1.msra.mxu0 0.0
    %778 = vmatprep.subr.mxu0 0.0
    %779 = vmatpush1.msra.mxu0 0.0
    %780 = vmatprep.subr.mxu0 0.0
    %781 = vmatpush1.msra.mxu0 0.0
    %782 = vmatprep.subr.mxu0 0.0
    %783 = vmatpush1.msra.mxu0 %v220
    %784 = vmatprep.subr.mxu0 0.0
    %785 = vmatpush1.msra.mxu0 %v219
    %786 = vmatprep.subr.mxu0 0.0
    %787 = vmatpush2.msra.mxu0 0.0
    %788 = vmatprep.subr.mxu0 0.0
    %789 = vmatpush2.msra.mxu0 0.0
    %790 = vmatprep.subr.mxu0 0.0
    %791 = vmatpush2.msra.mxu0 0.0
    %792 = vmatprep.subr.mxu0 0.0
    %793 = vmatpush2.msra.mxu0 0.0
    %794 = vmatprep.subr.mxu0 0.0
    %795 = vmatpush2.msra.mxu0 0.0
    %796 = vmatprep.subr.mxu0 0.0
    %797 = vmatpush2.msra.mxu0 0.0
    %798 = vmatprep.subr.mxu0 0.0
    %799 = vmatpush2.msra.mxu0 0.0
    %800 = vmatprep.subr.mxu0 0.0
    %801 = vmatpush2.msra.mxu0 0.0
    %802 = vmatprep.subr.mxu0 0.0
    %803 = vmatpush2.msra.mxu0 0.0
    %804 = vmatprep.subr.mxu0 0.0
    %805 = vmatpush2.msra.mxu0 0.0
    %806 = vmatprep.subr.mxu0 0.0
    %807 = vmatpush2.msra.mxu0 0.0
    %808 = vmatprep.subr.mxu0 0.0
    %809 = vmatpush2.msra.mxu0 0.0
    %810 = vmatprep.subr.mxu0 0.0
    %811 = vmatpush2.msra.mxu0 0.0
    %812 = vmatprep.subr.mxu0 0.0
    %813 = vmatpush2.msra.mxu0 0.0
    %814 = vmatprep.subr.mxu0 0.0
    %815 = vmatpush2.msra.mxu0 0.0
    %816 = vmatprep.subr.mxu0 0.0
    %817 = vmatpush2.msra.mxu0 0.0
    %818 = vmatprep.mubr.f32.mxu0 0.0
    %819 = vmatmul.mubr.f32.gmra.mxu0 %v749
    %v820 = vpop.f32.mrf.mxu0
    %v821 = vadd.f32 0.0, %v820
    %v822 = vpop.f32.mrf.mxu0
    %823 = vmatprep.mubr.f32.mxu0 0.0
    %824 = vmatmul.mubr.f32.gmra.mxu0 %v752
    %v825 = vpop.f32.mrf.mxu0
    %v826 = vadd.f32 0.0, %v825
    %v827 = vpop.f32.mrf.mxu0
    %828 = vdwg.mxu0
    %v830 = vsel %vm578, %v660, 0
    %v833 = vsel %vm578, %v662, 0
    %835 = vmatprep.subr.mxu0 0.0
    %836 = vmatpush1.msra.mxu0 0.0
    %837 = vmatprep.subr.mxu0 0.0
    %838 = vmatpush1.msra.mxu0 0.0
    %839 = vmatprep.subr.mxu0 0.0
    %840 = vmatpush1.msra.mxu0 0.0
    %841 = vmatprep.subr.mxu0 0.0
    %842 = vmatpush1.msra.mxu0 0.0
    %843 = vmatprep.subr.mxu0 0.0
    %844 = vmatpush1.msra.mxu0 0.0
    %845 = vmatprep.subr.mxu0 0.0
    %846 = vmatpush1.msra.mxu0 0.0
    %847 = vmatprep.subr.mxu0 0.0
    %848 = vmatpush1.msra.mxu0 0.0
    %849 = vmatprep.subr.mxu0 0.0
    %850 = vmatpush1.msra.mxu0 0.0
    %851 = vmatprep.subr.mxu0 0.0
    %852 = vmatpush1.msra.mxu0 0.0
    %853 = vmatprep.subr.mxu0 0.0
    %854 = vmatpush1.msra.mxu0 0.0
    %855 = vmatprep.subr.mxu0 0.0
    %856 = vmatpush1.msra.mxu0 0.0
    %857 = vmatprep.subr.mxu0 0.0
    %858 = vmatpush1.msra.mxu0 0.0
    %859 = vmatprep.subr.mxu0 0.0
    %860 = vmatpush1.msra.mxu0 0.0
    %861 = vmatprep.subr.mxu0 0.0
    %862 = vmatpush1.msra.mxu0 0.0
    %863 = vmatprep.subr.mxu0 0.0
    %864 = vmatpush1.msra.mxu0 %v252
    %865 = vmatprep.subr.mxu0 0.0
    %866 = vmatpush1.msra.mxu0 %v251
    %867 = vmatprep.subr.mxu0 0.0
    %868 = vmatpush2.msra.mxu0 0.0
    %869 = vmatprep.subr.mxu0 0.0
    %870 = vmatpush2.msra.mxu0 0.0
    %871 = vmatprep.subr.mxu0 0.0
    %872 = vmatpush2.msra.mxu0 0.0
    %873 = vmatprep.subr.mxu0 0.0
    %874 = vmatpush2.msra.mxu0 0.0
    %875 = vmatprep.subr.mxu0 0.0
    %876 = vmatpush2.msra.mxu0 0.0
    %877 = vmatprep.subr.mxu0 0.0
    %878 = vmatpush2.msra.mxu0 0.0
    %879 = vmatprep.subr.mxu0 0.0
    %880 = vmatpush2.msra.mxu0 0.0
    %881 = vmatprep.subr.mxu0 0.0
    %882 = vmatpush2.msra.mxu0 0.0
    %883 = vmatprep.subr.mxu0 0.0
    %884 = vmatpush2.msra.mxu0 0.0
    %885 = vmatprep.subr.mxu0 0.0
    %886 = vmatpush2.msra.mxu0 0.0
    %887 = vmatprep.subr.mxu0 0.0
    %888 = vmatpush2.msra.mxu0 0.0
    %889 = vmatprep.subr.mxu0 0.0
    %890 = vmatpush2.msra.mxu0 0.0
    %891 = vmatprep.subr.mxu0 0.0
    %892 = vmatpush2.msra.mxu0 0.0
    %893 = vmatprep.subr.mxu0 0.0
    %894 = vmatpush2.msra.mxu0 0.0
    %895 = vmatprep.subr.mxu0 0.0
    %896 = vmatpush2.msra.mxu0 0.0
    %897 = vmatprep.subr.mxu0 0.0
    %898 = vmatpush2.msra.mxu0 0.0
    %899 = vmatprep.mubr.f32.mxu0 0.0
    %900 = vmatmul.mubr.f32.gmra.mxu0 %v830
    %v901 = vpop.f32.mrf.mxu0
    %v902 = vadd.f32 0.0, %v901
    %v903 = vpop.f32.mrf.mxu0
    %904 = vmatprep.mubr.f32.mxu0 0.0
    %905 = vmatmul.mubr.f32.gmra.mxu0 %v833
    %v906 = vpop.f32.mrf.mxu0
    %v907 = vadd.f32 0.0, %v906
    %v908 = vpop.f32.mrf.mxu0
    %909 = vdwg.mxu0
    %v911 = vsel %vm578, %v664, 0
    %v914 = vsel %vm578, %v666, 0
    %916 = vmatprep.subr.mxu0 0.0
    %917 = vmatpush1.msra.mxu0 0.0
    %918 = vmatprep.subr.mxu0 0.0
    %919 = vmatpush1.msra.mxu0 0.0
    %920 = vmatprep.subr.mxu0 0.0
    %921 = vmatpush1.msra.mxu0 0.0
    %922 = vmatprep.subr.mxu0 0.0
    %923 = vmatpush1.msra.mxu0 0.0
    %924 = vmatprep.subr.mxu0 0.0
    %925 = vmatpush1.msra.mxu0 0.0
    %926 = vmatprep.subr.mxu0 0.0
    %927 = vmatpush1.msra.mxu0 0.0
    %928 = vmatprep.subr.mxu0 0.0
    %929 = vmatpush1.msra.mxu0 0.0
    %930 = vmatprep.subr.mxu0 0.0
    %931 = vmatpush1.msra.mxu0 0.0
    %932 = vmatprep.subr.mxu0 0.0
    %933 = vmatpush1.msra.mxu0 0.0
    %934 = vmatprep.subr.mxu0 0.0
    %935 = vmatpush1.msra.mxu0 0.0
    %936 = vmatprep.subr.mxu0 0.0
    %937 = vmatpush1.msra.mxu0 0.0
    %938 = vmatprep.subr.mxu0 0.0
    %939 = vmatpush1.msra.mxu0 0.0
    %940 = vmatprep.subr.mxu0 0.0
    %941 = vmatpush1.msra.mxu0 0.0
    %942 = vmatprep.subr.mxu0 0.0
    %943 = vmatpush1.msra.mxu0 0.0
    %944 = vmatprep.subr.mxu0 0.0
    %945 = vmatpush1.msra.mxu0 %v284
    %946 = vmatprep.subr.mxu0 0.0
    %947 = vmatpush1.msra.mxu0 %v283
    %948 = vmatprep.subr.mxu0 0.0
    %949 = vmatpush2.msra.mxu0 0.0
    %950 = vmatprep.subr.mxu0 0.0
    %951 = vmatpush2.msra.mxu0 0.0
    %952 = vmatprep.subr.mxu0 0.0
    %953 = vmatpush2.msra.mxu0 0.0
    %954 = vmatprep.subr.mxu0 0.0
    %955 = vmatpush2.msra.mxu0 0.0
    %956 = vmatprep.subr.mxu0 0.0
    %957 = vmatpush2.msra.mxu0 0.0
    %958 = vmatprep.subr.mxu0 0.0
    %959 = vmatpush2.msra.mxu0 0.0
    %960 = vmatprep.subr.mxu0 0.0
    %961 = vmatpush2.msra.mxu0 0.0
    %962 = vmatprep.subr.mxu0 0.0
    %963 = vmatpush2.msra.mxu0 0.0
    %964 = vmatprep.subr.mxu0 0.0
    %965 = vmatpush2.msra.mxu0 0.0
    %966 = vmatprep.subr.mxu0 0.0
    %967 = vmatpush2.msra.mxu0 0.0
    %968 = vmatprep.subr.mxu0 0.0
    %969 = vmatpush2.msra.mxu0 0.0
    %970 = vmatprep.subr.mxu0 0.0
    %971 = vmatpush2.msra.mxu0 0.0
    %972 = vmatprep.subr.mxu0 0.0
    %973 = vmatpush2.msra.mxu0 0.0
    %974 = vmatprep.subr.mxu0 0.0
    %975 = vmatpush2.msra.mxu0 0.0
    %976 = vmatprep.subr.mxu0 0.0
    %977 = vmatpush2.msra.mxu0 0.0
    %978 = vmatprep.subr.mxu0 0.0
    %979 = vmatpush2.msra.mxu0 0.0
    %980 = vmatprep.mubr.f32.mxu0 0.0
    %981 = vmatmul.mubr.f32.gmra.mxu0 %v911
    %v982 = vpop.f32.mrf.mxu0
    %v983 = vadd.f32 0.0, %v982
    %v984 = vpop.f32.mrf.mxu0
    %985 = vmatprep.mubr.f32.mxu0 0.0
    %986 = vmatmul.mubr.f32.gmra.mxu0 %v914
    %v987 = vpop.f32.mrf.mxu0
    %v988 = vadd.f32 0.0, %v987
    %v989 = vpop.f32.mrf.mxu0
    %990 = vdwg.mxu0
    %vm991 = vcmp.gt.f32.partialorder %v740, 0.0
    %vm992 = vcmp.gt.f32.partialorder %v745, 0.0
    %vm993 = vcmp.gt.f32.partialorder %v821, 0.0
    %vm994 = vcmp.gt.f32.partialorder %v826, 0.0
    %vm995 = vcmp.gt.f32.partialorder %v902, 0.0
    %vm996 = vcmp.gt.f32.partialorder %v907, 0.0
    %vm997 = vcmp.gt.f32.partialorder %v983, 0.0
    %vm998 = vcmp.gt.f32.partialorder %v988, 0.0
    %v999 = vmin.f32 %v740, 0.0
    %v1000 = vmin.f32 %v745, 0.0
    %v1001 = vmin.f32 %v821, 0.0
    %v1002 = vmin.f32 %v826, 0.0
    %v1003 = vmin.f32 %v902, 0.0
    %v1004 = vmin.f32 %v907, 0.0
    %v1005 = vmin.f32 %v983, 0.0
    %v1006 = vmin.f32 %v988, 0.0
    %v1007 = vmul.f32 %v999, 1.442695
    %v1008 = vpow.pop %v1007
    %v1009 = vmul.f32 %v1000, 1.442695
    %v1010 = vpow.pop %v1009
    %v1011 = vmul.f32 %v1001, 1.442695
    %v1012 = vpow.pop %v1011
    %v1013 = vmul.f32 %v1002, 1.442695
    %v1014 = vpow.pop %v1013
    %v1015 = vmul.f32 %v1003, 1.442695
    %v1016 = vpow.pop %v1015
    %v1017 = vmul.f32 %v1004, 1.442695
    %v1018 = vpow.pop %v1017
    %v1019 = vmul.f32 %v1005, 1.442695
    %v1020 = vpow.pop %v1019
    %v1021 = vmul.f32 %v1006, 1.442695
    %v1022 = vpow.pop %v1021
    %v1023 = vsub.f32 %v1008, 1.0
    %v1024 = vsub.f32 %v1010, 1.0
    %v1025 = vsub.f32 %v1012, 1.0
    %v1026 = vsub.f32 %v1014, 1.0
    %v1027 = vsub.f32 %v1016, 1.0
    %v1028 = vsub.f32 %v1018, 1.0
    %v1029 = vsub.f32 %v1020, 1.0
    %v1030 = vsub.f32 %v1022, 1.0
    %v1031 = vsel %vm991, %v740, %v1023
    %v1032 = vsel %vm992, %v745, %v1024
    %v1033 = vsel %vm993, %v821, %v1025
    %v1034 = vsel %vm994, %v826, %v1026
    %v1035 = vsel %vm995, %v902, %v1027
    %v1036 = vsel %vm996, %v907, %v1028
    %v1037 = vsel %vm997, %v983, %v1029
    %v1038 = vsel %vm998, %v988, %v1030
    %1039 = vxpose.xlu0.b32.start [1/16] %v1031, 128
    %1040 = vxpose.xlu0.b32.cont [2/16] %v1032, 128
    %1041 = vxpose.xlu0.b32.cont [3/16] 0.0, 128
    %1042 = vxpose.xlu0.b32.cont [4/16] 0.0, 128
    %1043 = vxpose.xlu0.b32.cont [5/16] 0.0, 128
    %1044 = vxpose.xlu0.b32.cont [6/16] 0.0, 128
    %1045 = vxpose.xlu0.b32.cont [7/16] 0.0, 128
    %1046 = vxpose.xlu0.b32.cont [8/16] 0.0, 128
    %1047 = vxpose.xlu0.b32.cont [9/16] 0.0, 128
    %1048 = vxpose.xlu0.b32.cont [10/16] 0.0, 128
    %1049 = vxpose.xlu0.b32.cont [11/16] 0.0, 128
    %1050 = vxpose.xlu0.b32.cont [12/16] 0.0, 128
    %1051 = vxpose.xlu0.b32.cont [13/16] 0.0, 128
    %1052 = vxpose.xlu0.b32.cont [14/16] 0.0, 128
    %1053 = vxpose.xlu0.b32.cont [15/16] 0.0, 128
    %1054 = vxpose.xlu0.b32.end [16/16] 0.0, 128
    %v1055 = vpop.trf.xlu0
    %v1056 = vpop.trf.xlu0
    %v1057 = vpop.trf.xlu0
    %v1058 = vpop.trf.xlu0
    %v1059 = vpop.trf.xlu0
    %v1060 = vpop.trf.xlu0
    %v1061 = vpop.trf.xlu0
    %v1062 = vpop.trf.xlu0
    %v1063 = vpop.trf.xlu0
    %v1064 = vpop.trf.xlu0
    %v1065 = vpop.trf.xlu0
    %v1066 = vpop.trf.xlu0
    %v1067 = vpop.trf.xlu0
    %v1068 = vpop.trf.xlu0
    %v1069 = vpop.trf.xlu0
    %v1070 = vpop.trf.xlu0
    %1071 = vxpose.xlu0.b32.start [1/16] %v1033, 128
    %1072 = vxpose.xlu0.b32.cont [2/16] %v1034, 128
    %1073 = vxpose.xlu0.b32.cont [3/16] 0.0, 128
    %1074 = vxpose.xlu0.b32.cont [4/16] 0.0, 128
    %1075 = vxpose.xlu0.b32.cont [5/16] 0.0, 128
    %1076 = vxpose.xlu0.b32.cont [6/16] 0.0, 128
    %1077 = vxpose.xlu0.b32.cont [7/16] 0.0, 128
    %1078 = vxpose.xlu0.b32.cont [8/16] 0.0, 128
    %1079 = vxpose.xlu0.b32.cont [9/16] 0.0, 128
    %1080 = vxpose.xlu0.b32.cont [10/16] 0.0, 128
    %1081 = vxpose.xlu0.b32.cont [11/16] 0.0, 128
    %1082 = vxpose.xlu0.b32.cont [12/16] 0.0, 128
    %1083 = vxpose.xlu0.b32.cont [13/16] 0.0, 128
    %1084 = vxpose.xlu0.b32.cont [14/16] 0.0, 128
    %1085 = vxpose.xlu0.b32.cont [15/16] 0.0, 128
    %1086 = vxpose.xlu0.b32.end [16/16] 0.0, 128
    %v1087 = vpop.trf.xlu0
    %v1088 = vpop.trf.xlu0
    %v1089 = vpop.trf.xlu0
    %v1090 = vpop.trf.xlu0
    %v1091 = vpop.trf.xlu0
    %v1092 = vpop.trf.xlu0
    %v1093 = vpop.trf.xlu0
    %v1094 = vpop.trf.xlu0
    %v1095 = vpop.trf.xlu0
    %v1096 = vpop.trf.xlu0
    %v1097 = vpop.trf.xlu0
    %v1098 = vpop.trf.xlu0
    %v1099 = vpop.trf.xlu0
    %v1100 = vpop.trf.xlu0
    %v1101 = vpop.trf.xlu0
    %v1102 = vpop.trf.xlu0
    %1103 = vxpose.xlu0.b32.start [1/16] %v1035, 128
    %1104 = vxpose.xlu0.b32.cont [2/16] %v1036, 128
    %1105 = vxpose.xlu0.b32.cont [3/16] 0.0, 128
    %1106 = vxpose.xlu0.b32.cont [4/16] 0.0, 128
    %1107 = vxpose.xlu0.b32.cont [5/16] 0.0, 128
    %1108 = vxpose.xlu0.b32.cont [6/16] 0.0, 128
    %1109 = vxpose.xlu0.b32.cont [7/16] 0.0, 128
    %1110 = vxpose.xlu0.b32.cont [8/16] 0.0, 128
    %1111 = vxpose.xlu0.b32.cont [9/16] 0.0, 128
    %1112 = vxpose.xlu0.b32.cont [10/16] 0.0, 128
    %1113 = vxpose.xlu0.b32.cont [11/16] 0.0, 128
    %1114 = vxpose.xlu0.b32.cont [12/16] 0.0, 128
    %1115 = vxpose.xlu0.b32.cont [13/16] 0.0, 128
    %1116 = vxpose.xlu0.b32.cont [14/16] 0.0, 128
    %1117 = vxpose.xlu0.b32.cont [15/16] 0.0, 128
    %1118 = vxpose.xlu0.b32.end [16/16] 0.0, 128
    %v1119 = vpop.trf.xlu0
    %v1120 = vpop.trf.xlu0
    %v1121 = vpop.trf.xlu0
    %v1122 = vpop.trf.xlu0
    %v1123 = vpop.trf.xlu0
    %v1124 = vpop.trf.xlu0
    %v1125 = vpop.trf.xlu0
    %v1126 = vpop.trf.xlu0
    %v1127 = vpop.trf.xlu0
    %v1128 = vpop.trf.xlu0
    %v1129 = vpop.trf.xlu0
    %v1130 = vpop.trf.xlu0
    %v1131 = vpop.trf.xlu0
    %v1132 = vpop.trf.xlu0
    %v1133 = vpop.trf.xlu0
    %v1134 = vpop.trf.xlu0
    %1135 = vxpose.xlu0.b32.start [1/16] %v1037, 128
    %1136 = vxpose.xlu0.b32.cont [2/16] %v1038, 128
    %1137 = vxpose.xlu0.b32.cont [3/16] 0.0, 128
    %1138 = vxpose.xlu0.b32.cont [4/16] 0.0, 128
    %1139 = vxpose.xlu0.b32.cont [5/16] 0.0, 128
    %1140 = vxpose.xlu0.b32.cont [6/16] 0.0, 128
    %1141 = vxpose.xlu0.b32.cont [7/16] 0.0, 128
    %1142 = vxpose.xlu0.b32.cont [8/16] 0.0, 128
    %1143 = vxpose.xlu0.b32.cont [9/16] 0.0, 128
    %1144 = vxpose.xlu0.b32.cont [10/16] 0.0, 128
    %1145 = vxpose.xlu0.b32.cont [11/16] 0.0, 128
    %1146 = vxpose.xlu0.b32.cont [12/16] 0.0, 128
    %1147 = vxpose.xlu0.b32.cont [13/16] 0.0, 128
    %1148 = vxpose.xlu0.b32.cont [14/16] 0.0, 128
    %1149 = vxpose.xlu0.b32.cont [15/16] 0.0, 128
    %1150 = vxpose.xlu0.b32.end [16/16] 0.0, 128
    %v1151 = vpop.trf.xlu0
    %v1152 = vpop.trf.xlu0
    %v1153 = vpop.trf.xlu0
    %v1154 = vpop.trf.xlu0
    %v1155 = vpop.trf.xlu0
    %v1156 = vpop.trf.xlu0
    %v1157 = vpop.trf.xlu0
    %v1158 = vpop.trf.xlu0
    %v1159 = vpop.trf.xlu0
    %v1160 = vpop.trf.xlu0
    %v1161 = vpop.trf.xlu0
    %v1162 = vpop.trf.xlu0
    %v1163 = vpop.trf.xlu0
    %v1164 = vpop.trf.xlu0
    %v1165 = vpop.trf.xlu0
    %v1166 = vpop.trf.xlu0
    %1167 = vxpose.xlu0.b32.start [1/16] %v1055, 128
    %1168 = vxpose.xlu0.b32.cont [2/16] %v1056, 128
    %1169 = vxpose.xlu0.b32.cont [3/16] %v1057, 128
    %1170 = vxpose.xlu0.b32.cont [4/16] %v1058, 128
    %1171 = vxpose.xlu0.b32.cont [5/16] %v1087, 128
    %1172 = vxpose.xlu0.b32.cont [6/16] %v1088, 128
    %1173 = vxpose.xlu0.b32.cont [7/16] %v1089, 128
    %1174 = vxpose.xlu0.b32.cont [8/16] %v1090, 128
    %1175 = vxpose.xlu0.b32.cont [9/16] %v1119, 128
    %1176 = vxpose.xlu0.b32.cont [10/16] %v1120, 128
    %1177 = vxpose.xlu0.b32.cont [11/16] %v1121, 128
    %1178 = vxpose.xlu0.b32.cont [12/16] %v1122, 128
    %1179 = vxpose.xlu0.b32.cont [13/16] %v1151, 128
    %1180 = vxpose.xlu0.b32.cont [14/16] %v1152, 128
    %1181 = vxpose.xlu0.b32.cont [15/16] %v1153, 128
    %1182 = vxpose.xlu0.b32.end [16/16] %v1154, 128
    %v1183 = vpop.trf.xlu0
    %v1184 = vpop.trf.xlu0
    %v1185 = vpop.trf.xlu0
    %v1186 = vpop.trf.xlu0
    %v1187 = vpop.trf.xlu0
    %v1188 = vpop.trf.xlu0
    %v1189 = vpop.trf.xlu0
    %v1190 = vpop.trf.xlu0
    %v1191 = vpop.trf.xlu0
    %v1192 = vpop.trf.xlu0
    %v1193 = vpop.trf.xlu0
    %v1194 = vpop.trf.xlu0
    %v1195 = vpop.trf.xlu0
    %v1196 = vpop.trf.xlu0
    %v1197 = vpop.trf.xlu0
    %v1198 = vpop.trf.xlu0
    %v1199 = vld [vmem:[%s6] sm:$0xff]
    %v1200 = vld [vmem:[%s6 + $0x8] sm:$0xff]
    %v1201 = vld [vmem:[%s6 + $0x10] sm:$0xff]
    %v1202 = vld [vmem:[%s6 + $0x18] sm:$0xff]
    %v1203 = vld [vmem:[%s6 + $0x20] sm:$0xff]
    %v1204 = vld [vmem:[%s6 + $0x28] sm:$0xff]
    %v1205 = vld [vmem:[%s6 + $0x30] sm:$0xff]
    %v1206 = vld [vmem:[%s6 + $0x38] sm:$0xff]
    %v1207 = vld [vmem:[%s6 + $0x40] sm:$0xff]
    %v1208 = vld [vmem:[%s6 + $0x48] sm:$0xff]
    %v1209 = vld [vmem:[%s6 + $0x50] sm:$0xff]
    %v1210 = vld [vmem:[%s6 + $0x58] sm:$0xff]
    %v1211 = vld [vmem:[%s6 + $0x60] sm:$0xff]
    %v1212 = vld [vmem:[%s6 + $0x68] sm:$0xff]
    %v1213 = vld [vmem:[%s6 + $0x70] sm:$0xff]
    %v1214 = vld [vmem:[%s6 + $0x78] sm:$0xff]
    %1215 = vmatprep.subr.mxu0 0.0
    %1216 = vmatpush1.msra.mxu0 %v1214
    %1217 = vmatprep.subr.mxu0 0.0
    %1218 = vmatpush1.msra.mxu0 %v1213
    %1219 = vmatprep.subr.mxu0 0.0
    %1220 = vmatpush1.msra.mxu0 %v1212
    %1221 = vmatprep.subr.mxu0 0.0
    %1222 = vmatpush1.msra.mxu0 %v1211
    %1223 = vmatprep.subr.mxu0 0.0
    %1224 = vmatpush1.msra.mxu0 %v1210
    %1225 = vmatprep.subr.mxu0 0.0
    %1226 = vmatpush1.msra.mxu0 %v1209
    %1227 = vmatprep.subr.mxu0 0.0
    %1228 = vmatpush1.msra.mxu0 %v1208
    %1229 = vmatprep.subr.mxu0 0.0
    %1230 = vmatpush1.msra.mxu0 %v1207
    %1231 = vmatprep.subr.mxu0 0.0
    %1232 = vmatpush1.msra.mxu0 %v1206
    %1233 = vmatprep.subr.mxu0 0.0
    %1234 = vmatpush1.msra.mxu0 %v1205
    %1235 = vmatprep.subr.mxu0 0.0
    %1236 = vmatpush1.msra.mxu0 %v1204
    %1237 = vmatprep.subr.mxu0 0.0
    %1238 = vmatpush1.msra.mxu0 %v1203
    %1239 = vmatprep.subr.mxu0 0.0
    %1240 = vmatpush1.msra.mxu0 %v1202
    %1241 = vmatprep.subr.mxu0 0.0
    %1242 = vmatpush1.msra.mxu0 %v1201
    %1243 = vmatprep.subr.mxu0 0.0
    %1244 = vmatpush1.msra.mxu0 %v1200
    %1245 = vmatprep.subr.mxu0 0.0
    %1246 = vmatpush1.msra.mxu0 %v1199
    %1247 = vmatprep.subr.mxu0 0.0
    %1248 = vmatpush2.msra.mxu0 0.0
    %1249 = vmatprep.subr.mxu0 0.0
    %1250 = vmatpush2.msra.mxu0 0.0
    %1251 = vmatprep.subr.mxu0 0.0
    %1252 = vmatpush2.msra.mxu0 0.0
    %1253 = vmatprep.subr.mxu0 0.0
    %1254 = vmatpush2.msra.mxu0 0.0
    %1255 = vmatprep.subr.mxu0 0.0
    %1256 = vmatpush2.msra.mxu0 0.0
    %1257 = vmatprep.subr.mxu0 0.0
    %1258 = vmatpush2.msra.mxu0 0.0
    %1259 = vmatprep.subr.mxu0 0.0
    %1260 = vmatpush2.msra.mxu0 0.0
    %1261 = vmatprep.subr.mxu0 0.0
    %1262 = vmatpush2.msra.mxu0 0.0
    %1263 = vmatprep.subr.mxu0 0.0
    %1264 = vmatpush2.msra.mxu0 0.0
    %1265 = vmatprep.subr.mxu0 0.0
    %1266 = vmatpush2.msra.mxu0 0.0
    %1267 = vmatprep.subr.mxu0 0.0
    %1268 = vmatpush2.msra.mxu0 0.0
    %1269 = vmatprep.subr.mxu0 0.0
    %1270 = vmatpush2.msra.mxu0 0.0
    %1271 = vmatprep.subr.mxu0 0.0
    %1272 = vmatpush2.msra.mxu0 0.0
    %1273 = vmatprep.subr.mxu0 0.0
    %1274 = vmatpush2.msra.mxu0 0.0
    %1275 = vmatprep.subr.mxu0 0.0
    %1276 = vmatpush2.msra.mxu0 0.0
    %1277 = vmatprep.subr.mxu0 0.0
    %1278 = vmatpush2.msra.mxu0 0.0
    %1279 = vmatprep.mubr.f32.mxu0 0.0
    %1280 = vmatmul.mubr.f32.gmra.mxu0 %v1183
    %v1281 = vpop.f32.mrf.mxu0
    %v1282 = vadd.f32 0.0, %v1281
    %v1283 = vpop.f32.mrf.mxu0
    %1284 = vmatprep.mubr.f32.mxu0 0.0
    %1285 = vmatmul.mubr.f32.gmra.mxu0 %v1184
    %v1286 = vpop.f32.mrf.mxu0
    %v1287 = vadd.f32 0.0, %v1286
    %v1288 = vpop.f32.mrf.mxu0
    %1289 = vdwg.mxu0
    %v1290 = vld [vmem:[%s7] sm:$0x1]
    %v1292 = vlaneseq
    %v1293 = vshrl.u32 %v1292, 7
    %v1294 = vsub.s32 0, %v1293
    %v1295 = vrot.slane %v1290, %v1294
    %v1297 = vmul.f32 %v1282, %v1295
    %v1298 = vmul.f32 %v1287, %v1295
    %v1299 = vsel %vm57, %v1297, 0.0
    %1300 = vadd.xlane.f32.xlu0 %v1299
    %v1301 = vpop.xlane.xlu0 %1300
    %v1302 = vsel %vm57, %v1298, 0.0
    %1303 = vadd.xlane.f32.xlu0 %v1302
    %v1304 = vpop.xlane.xlu0 %1303
    %v1305 = vld [vmem:[%s8] sm:$0x1]
    %v1307 = vlaneseq
    %v1308 = vshrl.u32 %v1307, 7
    %v1309 = vsub.s32 0, %v1308
    %v1310 = vrot.slane %v1305, %v1309
    %v1312 = vmul.f32 %v1282, %v1310
    %v1313 = vmul.f32 %v1287, %v1310
    %v1314 = vsel %vm57, %v1312, 0.0
    %1315 = vadd.xlane.f32.xlu0 %v1314
    %v1316 = vpop.xlane.xlu0 %1315
    %v1317 = vsel %vm57, %v1313, 0.0
    %1318 = vadd.xlane.f32.xlu0 %v1317
    %v1319 = vpop.xlane.xlu0 %1318
    %1320 = vxpose.xlu0.b32.start [1/16] %v1316, 128
    %1321 = vxpose.xlu0.b32.cont [2/16] %v1319, 128
    %1322 = vxpose.xlu0.b32.cont [3/16] 0.0, 128
    %1323 = vxpose.xlu0.b32.cont [4/16] 0.0, 128
    %1324 = vxpose.xlu0.b32.cont [5/16] 0.0, 128
    %1325 = vxpose.xlu0.b32.cont [6/16] 0.0, 128
    %1326 = vxpose.xlu0.b32.cont [7/16] 0.0, 128
    %1327 = vxpose.xlu0.b32.cont [8/16] 0.0, 128
    %1328 = vxpose.xlu0.b32.cont [9/16] 0.0, 128
    %1329 = vxpose.xlu0.b32.cont [10/16] 0.0, 128
    %1330 = vxpose.xlu0.b32.cont [11/16] 0.0, 128
    %1331 = vxpose.xlu0.b32.cont [12/16] 0.0, 128
    %1332 = vxpose.xlu0.b32.cont [13/16] 0.0, 128
    %1333 = vxpose.xlu0.b32.cont [14/16] 0.0, 128
    %1334 = vxpose.xlu0.b32.cont [15/16] 0.0, 128
    %1335 = vxpose.xlu0.b32.end [16/16] 0.0, 128
    %v1336 = vpop.trf.xlu0
    %v1337 = vpop.trf.xlu0
    %v1338 = vpop.trf.xlu0
    %v1339 = vpop.trf.xlu0
    %v1340 = vpop.trf.xlu0
    %v1341 = vpop.trf.xlu0
    %v1342 = vpop.trf.xlu0
    %v1343 = vpop.trf.xlu0
    %v1344 = vpop.trf.xlu0
    %v1345 = vpop.trf.xlu0
    %v1346 = vpop.trf.xlu0
    %v1347 = vpop.trf.xlu0
    %v1348 = vpop.trf.xlu0
    %v1349 = vpop.trf.xlu0
    %v1350 = vpop.trf.xlu0
    %v1351 = vpop.trf.xlu0
    %v1352 = vlaneseq
    %v1353 = vshrl.u32 %v1352, 7
    %v1354 = vsub.s32 0, %v1353
    %v1355 = vrot.slane %v1336, %v1354
    %v1356 = vadd.f32 %v1301, %v1355
    %v1357 = vadd.f32 %v1304, %v1355
    %vm1358 = vcmp.gt.f32.partialorder %v1356, 0.0
    %vm1359 = vcmp.gt.f32.partialorder %v1357, 0.0
    %v1360 = vmul.f32 %v1356, 0.2
    %v1361 = vmul.f32 %v1357, 0.2
    %v1362 = vsel %vm1358, %v1356, %v1360
    %v1363 = vsel %vm1359, %v1357, %v1361
    %v1364 = vadd.f32 %v1362, %v51
    %v1365 = vadd.f32 %v1363, %v52
    %v1366 = vsel %vm578, %v1364, -inf
    %1367 = vmax.xlane.f32.xlu0 %v1366
    %v1368 = vpop.xlane.xlu0 %1367
    %v1369 = vsel %vm578, %v1365, -inf
    %1370 = vmax.xlane.f32.xlu0 %v1369
    %v1371 = vpop.xlane.xlu0 %1370
    %v1372 = vsub.f32 %v1364, %v1368
    %v1373 = vsub.f32 %v1365, %v1371
    %v1374 = vmul.f32 %v1372, 1.442695
    %v1375 = vpow.pop %v1374
    %v1376 = vmul.f32 %v1373, 1.442695
    %v1377 = vpow.pop %v1376
    %v1378 = vsel %vm578, %v1375, 0.0
    %1379 = vadd.xlane.f32.xlu0 %v1378
    %v1380 = vpop.xlane.xlu0 %1379
    %v1381 = vsel %vm578, %v1377, 0.0
    %1382 = vadd.xlane.f32.xlu0 %v1381
    %v1383 = vpop.xlane.xlu0 %1382
    %v1384 = vrcp.pop %v1380
    %v1385 = vmul.f32 %v1375, %v1384
    %v1386 = vrcp.pop %v1383
    %v1387 = vmul.f32 %v1377, %v1386
    %v1389 = vsel %vm578, %v1385, 0
    %v1392 = vsel %vm578, %v1387, 0
    %1394 = vmatprep.subr.mxu0 0.0
    %1395 = vmatpush1.msra.mxu0 0.0
    %1396 = vmatprep.subr.mxu0 0.0
    %1397 = vmatpush1.msra.mxu0 0.0
    %1398 = vmatprep.subr.mxu0 0.0
    %1399 = vmatpush1.msra.mxu0 0.0
    %1400 = vmatprep.subr.mxu0 0.0
    %1401 = vmatpush1.msra.mxu0 0.0
    %1402 = vmatprep.subr.mxu0 0.0
    %1403 = vmatpush1.msra.mxu0 0.0
    %1404 = vmatprep.subr.mxu0 0.0
    %1405 = vmatpush1.msra.mxu0 0.0
    %1406 = vmatprep.subr.mxu0 0.0
    %1407 = vmatpush1.msra.mxu0 0.0
    %1408 = vmatprep.subr.mxu0 0.0
    %1409 = vmatpush1.msra.mxu0 0.0
    %1410 = vmatprep.subr.mxu0 0.0
    %1411 = vmatpush1.msra.mxu0 0.0
    %1412 = vmatprep.subr.mxu0 0.0
    %1413 = vmatpush1.msra.mxu0 0.0
    %1414 = vmatprep.subr.mxu0 0.0
    %1415 = vmatpush1.msra.mxu0 0.0
    %1416 = vmatprep.subr.mxu0 0.0
    %1417 = vmatpush1.msra.mxu0 0.0
    %1418 = vmatprep.subr.mxu0 0.0
    %1419 = vmatpush1.msra.mxu0 0.0
    %1420 = vmatprep.subr.mxu0 0.0
    %1421 = vmatpush1.msra.mxu0 0.0
    %1422 = vmatprep.subr.mxu0 0.0
    %1423 = vmatpush1.msra.mxu0 %v1287
    %1424 = vmatprep.subr.mxu0 0.0
    %1425 = vmatpush1.msra.mxu0 %v1282
    %1426 = vmatprep.subr.mxu0 0.0
    %1427 = vmatpush2.msra.mxu0 0.0
    %1428 = vmatprep.subr.mxu0 0.0
    %1429 = vmatpush2.msra.mxu0 0.0
    %1430 = vmatprep.subr.mxu0 0.0
    %1431 = vmatpush2.msra.mxu0 0.0
    %1432 = vmatprep.subr.mxu0 0.0
    %1433 = vmatpush2.msra.mxu0 0.0
    %1434 = vmatprep.subr.mxu0 0.0
    %1435 = vmatpush2.msra.mxu0 0.0
    %1436 = vmatprep.subr.mxu0 0.0
    %1437 = vmatpush2.msra.mxu0 0.0
    %1438 = vmatprep.subr.mxu0 0.0
    %1439 = vmatpush2.msra.mxu0 0.0
    %1440 = vmatprep.subr.mxu0 0.0
    %1441 = vmatpush2.msra.mxu0 0.0
    %1442 = vmatprep.subr.mxu0 0.0
    %1443 = vmatpush2.msra.mxu0 0.0
    %1444 = vmatprep.subr.mxu0 0.0
    %1445 = vmatpush2.msra.mxu0 0.0
    %1446 = vmatprep.subr.mxu0 0.0
    %1447 = vmatpush2.msra.mxu0 0.0
    %1448 = vmatprep.subr.mxu0 0.0
    %1449 = vmatpush2.msra.mxu0 0.0
    %1450 = vmatprep.subr.mxu0 0.0
    %1451 = vmatpush2.msra.mxu0 0.0
    %1452 = vmatprep.subr.mxu0 0.0
    %1453 = vmatpush2.msra.mxu0 0.0
    %1454 = vmatprep.subr.mxu0 0.0
    %1455 = vmatpush2.msra.mxu0 0.0
    %1456 = vmatprep.subr.mxu0 0.0
    %1457 = vmatpush2.msra.mxu0 0.0
    %1458 = vmatprep.mubr.f32.mxu0 0.0
    %1459 = vmatmul.mubr.f32.gmra.mxu0 %v1389
    %v1460 = vpop.f32.mrf.mxu0
    %v1461 = vadd.f32 0.0, %v1460
    %v1462 = vpop.f32.mrf.mxu0
    %1463 = vmatprep.mubr.f32.mxu0 0.0
    %1464 = vmatmul.mubr.f32.gmra.mxu0 %v1392
    %v1465 = vpop.f32.mrf.mxu0
    %v1466 = vadd.f32 0.0, %v1465
    %v1467 = vpop.f32.mrf.mxu0
    %1468 = vdwg.mxu0
    %vm1469 = vcmp.gt.f32.partialorder %v1461, 0.0
    %vm1470 = vcmp.gt.f32.partialorder %v1466, 0.0
    %v1471 = vmin.f32 %v1461, 0.0
    %v1472 = vmin.f32 %v1466, 0.0
    %v1473 = vmul.f32 %v1471, 1.442695
    %v1474 = vpow.pop %v1473
    %v1475 = vmul.f32 %v1472, 1.442695
    %v1476 = vpow.pop %v1475
    %v1477 = vsub.f32 %v1474, 1.0
    %v1478 = vsub.f32 %v1476, 1.0
    %v1479 = vsel %vm1469, %v1461, %v1477
    %v1480 = vsel %vm1470, %v1466, %v1478
    %v1481 = vadd.f32 %v1479, %v44
    %v1482 = vadd.f32 %v1480, %v45
    %1483 = vst.msk [vmem:[#allocation3] sm:$0xff] %vm57, %v1481
    %1484 = vst.msk [vmem:[#allocation3 + $0x8] sm:$0xff] %vm57, %v1482
    %v1485 = vld [vmem:[%s9] sm:$0x1]
    %v1487 = vlaneseq
    %v1488 = vshrl.u32 %v1487, 7
    %v1489 = vsub.s32 0, %v1488
    %v1490 = vrot.slane %v1485, %v1489
    %v1492 = vmul.f32 %v1481, %v1490
    %v1493 = vmul.f32 %v1482, %v1490
    %v1494 = vsel %vm57, %v1492, 0.0
    %1495 = vadd.xlane.f32.xlu0 %v1494
    %v1496 = vpop.xlane.xlu0 %1495
    %v1497 = vsel %vm57, %v1493, 0.0
    %1498 = vadd.xlane.f32.xlu0 %v1497
    %v1499 = vpop.xlane.xlu0 %1498
    %v1500 = vld [vmem:[#allocation2] sm:$0x1]
    %v1502 = vlaneseq
    %v1503 = vshrl.u32 %v1502, 7
    %v1504 = vsub.s32 0, %v1503
    %v1505 = vrot.slane %v1500, %v1504
    %1506 = vset.pattern.permute.xlu0 0
    %1507 = vperm.xlu0 %1506, %v1505
    %v1508 = vpop.permute.xlu0 %1507
    %v1510 = vadd.f32 %v1496, %v1508
    %v1511 = vadd.f32 %v1499, %v1508
    %v1512 = vsub.f32 0.0, %v1510
    %v1513 = vsub.f32 0.0, %v1511
    %v1514 = vmul.f32 %v1512, 1.442695
    %v1515 = vpow.pop %v1514
    %v1516 = vmul.f32 %v1513, 1.442695
    %v1517 = vpow.pop %v1516
    %v1518 = vadd.f32 %v1515, 1.0
    %v1519 = vadd.f32 %v1517, 1.0
    %v1520 = vrcp.pop %v1518
    %v1521 = vmul.f32 1.0, %v1520
    %v1522 = vrcp.pop %v1519
    %v1523 = vmul.f32 1.0, %v1522
    %v1525 = vlaneseq
    %v1526 = vshrl.u32 %v1525, 7
    %v1527 = vsub.s32 0, %v1526
    %v1528 = vrot.slane %v46, %v1527
    %1530 = vbcast.lane.b32.xlu0 %v1528, 256
    %v1531 = vpop.permute.xlu0 %1530
    %v1532 = vlaneseq
    %v1533 = vshrl.u32 %v1532, 7
    %v1534 = vsub.s32 1, %v1533
    %v1535 = vrot.slane %v46, %v1534
    %1537 = vbcast.lane.b32.xlu0 %v1535, 256
    %v1538 = vpop.permute.xlu0 %1537
    %v1541 = vmul.f32 %v1521, %v1531
    %v1542 = vmul.f32 %v1523, %v1538
    %1545 = vset.pattern.permute.xlu0 0
    %1546 = vperm.xlu0 %1545, %v1541
    %v1547 = vpop.permute.xlu0 %1546
    %1548 = vset.pattern.permute.xlu0 0
    %1549 = vperm.xlu0 %1548, %v1542
    %v1550 = vpop.permute.xlu0 %1549
    %v1551 = vlaneseq
    %v1552 = vshrl.u32 %v1551, 7
    %v1553 = vsub.s32 %v464, %v1552
    %v1554 = vrot.slane %v1547, %v1553
    %v1555 = vlaneseq
    %v1556 = vshrl.u32 %v1555, 7
    %v1557 = vsub.s32 %v464, %v1556
    %v1558 = vrot.slane %v1550, %v1557
    %v1559 = vsel %vm503, %v1558, %v1554
    %vm1561 = vcmask 58368
    %1562 = vst.msk [vmem:[#allocation5] sm:$0x3] %vm1561, %v1559
    // Predicated region
    $region46: #{tpu_custom_call.1} parent=1 // pred_check
      _
    $region47: #{tpu_custom_call.1} parent=1 // pred_check_branch
      %1564 = sbr.rel (0) target = $region49
    $region48: #{tpu_custom_call.1} parent=1 // pred_region
      %s1566 = ssub.s32 256, 256
      %1567 = vsyncadd [#allocation4], %s1566
      %s1568 = sshll.u32 [#allocation3], 4
      %s1569 = int_to_ptr.vmem [resolvable:$true] %s1568
      %1574 = dma.vmem_to_hbm [thread:$0]  %s1569, 256, %s11, [#allocation4], 128, 128, 8
    $region49: #{tpu_custom_call.1} parent=1 // pred_fallthru
      _
    // Predicated region
    $region50: #{tpu_custom_call.1} parent=1 // pred_check
      _
    $region51: #{tpu_custom_call.1} parent=1 // pred_check_branch
      %1576 = sbr.rel (0) target = $region53
    $region52: #{tpu_custom_call.1} parent=1 // pred_region
      %s1578 = ssub.s32 32, 32
      %1579 = vsyncadd [#allocation6], %s1578
      %s1581 = sshll.u32 [#allocation5], 4
      %s1582 = int_to_ptr.vmem [resolvable:$true] %s1581
      %1584 = dma.vmem_to_hbm [thread:$0]  %s1582, 32, %s12, [#allocation6]
    $region53: #{tpu_custom_call.1} parent=1 // pred_fallthru
      _
    // Predicated region
    $region54: #{tpu_custom_call.1} parent=1 // pred_check
      _
    $region55: #{tpu_custom_call.1} parent=1 // pred_check_branch
      %1586 = sbr.rel (0) target = $region57
    $region56: #{tpu_custom_call.1} parent=1 // pred_region
      %1587 = dma.done [#allocation4], 256
    $region57: #{tpu_custom_call.1} parent=1 // pred_fallthru
      _
    // Predicated region
    $region58: #{tpu_custom_call.1} parent=1 // pred_check
      _
    $region59: #{tpu_custom_call.1} parent=1 // pred_check_branch
      %1589 = sbr.rel (0) target = $region61
    $region60: #{tpu_custom_call.1} parent=1 // pred_region
      %1590 = dma.done [#allocation6], 32
    $region61: #{tpu_custom_call.1} parent=1 // pred_fallthru
      _
    %1591 = vsyncpa [#allocation4], 1
    %1592 = vsyncpa [#allocation6], 1

</llo_original>
